<compile_context>
chip_gen: v5e
topology: v5e:2x2
jax: 0.10.0
libtpu: 0.0.40
codegen_flags: <defaults>
</compile_context>

<pallas_src>
import jax
import jax.numpy as jnp
from jax.experimental import pallas as pl
from jax.experimental.pallas import tpu as pltpu


# ---------------------------------------------------------------------------
# helpers
# ---------------------------------------------------------------------------

_LANE = 128
_SUBLANE = 8
_VMEM_SPEC = pl.BlockSpec(memory_space=pltpu.MemorySpace.VMEM)
_COMPUTE_DTYPE = jnp.bfloat16          # MXU operand dtype; accumulation stays f32


def _round_up(x, m):
    return ((x + m - 1) // m) * m


# ---------------------------------------------------------------------------
# Fused Pallas kernel: all RNN layers (wavefront) + FC in one call
# ---------------------------------------------------------------------------

def _make_rnn_model_kernel(num_layers, num_steps):
    """Builds the fused kernel.

    Ref layout (positional):
      x_ref                          (num_steps*B_pad, In_pad)   bf16, time-major rows
      per layer l: w_ih_t, w_hh_t    (in_pad, H_pad), (H_pad, H_pad)   bf16
                   bias              (1, H_pad)                  f32  (= b_ih + b_hh)
      wfc_ref                        (num_steps, H_pad, F_pad)   bf16 sliced+padded FC weight
      bfc_ref                        (1, F_pad)                  f32
      out_ref                        (B_pad, F_pad)              f32
      seq_buf (scratch)              (num_steps*B_pad, H_pad)    f32  layer-0 pre-activations
    """

    def kernel(*refs):
        x_ref = refs[0]
        w_refs = refs[1:1 + 3 * num_layers]
        wfc_ref = refs[1 + 3 * num_layers]
        bfc_ref = refs[2 + 3 * num_layers]
        out_ref = refs[3 + 3 * num_layers]
        seq_buf = refs[4 + 3 * num_layers]

        B_pad, F_pad = out_ref.shape
        H_pad = seq_buf.shape[-1]

        # Weights loaded once, resident across the (fully static) schedule.
        w_ih = [w_refs[3 * l][...] for l in range(num_layers)]
        w_hh = [w_refs[3 * l + 1][...] for l in range(num_layers)]
        bias = [w_refs[3 * l + 2][...] for l in range(num_layers)]

        # ---- hoisted layer-0 input projection: ONE big MXU matmul off the serial
        #      dependence chain (bias already folded in).
        pre0 = (jnp.dot(x_ref[...], w_ih[0],
                        preferred_element_type=jnp.float32) + bias[0])
        seq_buf[...] = pre0

        # ---- wavefront recurrence: super-step s computes (layer l, timestep t = s-l).
        #      h lives in vregs; within a super-step all layers read the PREVIOUS
        #      super-step's carries, so their matmuls are independent and pipeline
        #      through the MXU.  The last layer's FC matmul rides along each step.
        h = [jnp.zeros((B_pad, H_pad), jnp.float32) for _ in range(num_layers)]
        acc = jnp.zeros((B_pad, F_pad), jnp.float32)

        for s in range(num_steps + num_layers - 1):
            h_new = list(h)
            for l in range(num_layers):
                t = s - l
                if not (0 <= t < num_steps):
                    continue                      # this layer idle at this super-step
                if l == 0:
                    pre = seq_buf[pl.ds(t * B_pad, B_pad), :]
                else:
                    # h[l-1] is h_{l-1, t} (computed last super-step) — wavefront input.
                    pre = (jnp.dot(h[l - 1].astype(_COMPUTE_DTYPE), w_ih[l],
                                   preferred_element_type=jnp.float32)
                           + bias[l])
                h_t = jnp.tanh(
                    pre + jnp.dot(h[l].astype(_COMPUTE_DTYPE), w_hh[l],
                                  preferred_element_type=jnp.float32))
                h_new[l] = h_t
                if l == num_layers - 1:
                    # Fused FC: out = b_fc + sum_t h_last[t] @ W_fc[:, t*H:(t+1)*H]^T
                    acc = acc + jnp.dot(h_t.astype(_COMPUTE_DTYPE), wfc_ref[t],
                                        preferred_element_type=jnp.float32)
            h = h_new

        out_ref[...] = acc + bfc_ref[...]

    return kernel


# ---------------------------------------------------------------------------
# One-time parameter preparation (pad + transpose + bias-sum + FC slice + bf16 cast)
# ---------------------------------------------------------------------------

def prepare_params(params, num_words):
    num_layers = len(params["rnn"])
    w_ih0 = params["rnn"][0][0]
    H = int(w_ih0.shape[0])
    In = int(w_ih0.shape[1])
    w_fc, b_fc = params["fc"]
    output_size, fc_in = int(w_fc.shape[0]), int(w_fc.shape[1])
    assert fc_in >= num_words * H

    H_pad = _round_up(H, _LANE)
    In_pad = _round_up(In, _LANE)
    F_pad = _round_up(output_size, _LANE)

    flat = []
    for layer, (w_ih, w_hh, b_ih, b_hh) in enumerate(params["rnn"]):
        in_dim = w_ih.shape[1]
        in_pad = In_pad if layer == 0 else H_pad
        w_ih_t = (jnp.zeros((in_pad, H_pad), _COMPUTE_DTYPE)
                  .at[:in_dim, :H].set(w_ih.T.astype(_COMPUTE_DTYPE)))
        w_hh_t = (jnp.zeros((H_pad, H_pad), _COMPUTE_DTYPE)
                  .at[:H, :H].set(w_hh.T.astype(_COMPUTE_DTYPE)))
        bias = (jnp.zeros((1, H_pad), jnp.float32)
                .at[0, :H].set((b_ih + b_hh).astype(jnp.float32)))
        flat += [w_ih_t, w_hh_t, bias]

    # Only the first num_words*H columns of the FC input are ever nonzero
    # (exactly what the PyTorch slot-copy loop fills), so slice the weight.
    w_used = w_fc[:, :num_words * H].reshape(output_size, num_words, H)
    wfc = jnp.zeros((num_words, H_pad, F_pad), _COMPUTE_DTYPE)
    wfc = wfc.at[:, :H, :output_size].set(
        jnp.transpose(w_used, (1, 2, 0)).astype(_COMPUTE_DTYPE))
    bfc = (jnp.zeros((1, F_pad), jnp.float32)
           .at[0, :output_size].set(b_fc.astype(jnp.float32)))

    return {
        "layer_weights_flat": flat,
        "w_fc_t": wfc,
        "b_fc": bfc,
        "num_layers": num_layers,
        "num_words": int(num_words),
        "hidden_size": H,
        "input_size": In,
        "output_size": output_size,
        "H_pad": H_pad,
        "In_pad": In_pad,
        "F_pad": F_pad,
    }


# ---------------------------------------------------------------------------
# Forward pass
# ---------------------------------------------------------------------------

def rnn_model_forward(x, plan):
    """x: (B, T, input_size), batch-first like PyTorch. Returns (B, output_size)."""
    B, T, In = x.shape
    nw = plan["num_words"]
    assert T >= nw, "sequence must cover num_words timesteps"
    assert In == plan["input_size"]

    B_pad = _round_up(max(B, 1), _SUBLANE)
    In_pad = plan["In_pad"]
    H_pad = plan["H_pad"]
    F_pad = plan["F_pad"]

    # Only the first num_words timesteps feed the output; slice BEFORE padding,
    # pad batch to sublanes / features to lanes, go time-major, flatten (t,b) rows,
    # cast to the MXU operand dtype.
    x_used = x[:, :nw, :].astype(jnp.float32)
    x_used = jnp.pad(x_used, ((0, B_pad - B), (0, 0), (0, In_pad - In)))
    x_tm = (jnp.transpose(x_used, (1, 0, 2))
            .reshape(nw * B_pad, In_pad)
            .astype(_COMPUTE_DTYPE))

    kernel = _make_rnn_model_kernel(plan["num_layers"], nw)
    inputs = [x_tm] + plan["layer_weights_flat"] + [plan["w_fc_t"], plan["b_fc"]]

    out_pad = pl.pallas_call(
        kernel,
        out_shape=jax.ShapeDtypeStruct((B_pad, F_pad), jnp.float32),
        in_specs=[_VMEM_SPEC] * len(inputs),
        out_specs=_VMEM_SPEC,
        scratch_shapes=[
            pltpu.VMEM((nw * B_pad, H_pad), jnp.float32),  # layer-0 pre-activations
        ],
    )(*inputs)

    return out_pad[:B, :plan["output_size"]]


# ---------------------------------------------------------------------------
# Pure-JAX f32 reference (mirrors the PyTorch forward exactly)
# ---------------------------------------------------------------------------

def rnn_model_reference(x, params, hidden_size, num_layers, num_words):
    B, T, _ = x.shape
    layer_in = x.astype(jnp.float32)
    for (w_ih, w_hh, b_ih, b_hh) in params["rnn"]:
        h = jnp.zeros((B, hidden_size), jnp.float32)
        outs = []
        for t in range(T):
            h = jnp.tanh(layer_in[:, t, :] @ w_ih.T + b_ih + h @ w_hh.T + b_hh)
            outs.append(h)
        layer_in = jnp.stack(outs, axis=1)
    H = hidden_size
    acc = jnp.zeros((B, num_words * H * num_layers), jnp.float32)
    acc = acc.at[:, :num_words * H].set(
        layer_in[:, :num_words, :].reshape(B, num_words * H))
    w_fc, b_fc = params["fc"]
    return acc @ w_fc.T + b_fc


# ---------------------------------------------------------------------------
# Deterministic parameter init (PyTorch-style uniform(-1/sqrt(fan), 1/sqrt(fan)))
# ---------------------------------------------------------------------------

def init_params(key, input_size, hidden_size, num_layers, output_size, num_words):
    params = {"rnn": [], "fc": None}
    bound_rnn = 1.0 / jnp.sqrt(hidden_size)
    for layer in range(num_layers):
        in_dim = input_size if layer == 0 else hidden_size
        key, k1, k2, k3, k4 = jax.random.split(key, 5)
        w_ih = jax.random.uniform(k1, (hidden_size, in_dim), jnp.float32,
                                  -bound_rnn, bound_rnn)
        w_hh = jax.random.uniform(k2, (hidden_size, hidden_size), jnp.float32,
                                  -bound_rnn, bound_rnn)
        b_ih = jax.random.uniform(k3, (hidden_size,), jnp.float32,
                                  -bound_rnn, bound_rnn)
        b_hh = jax.random.uniform(k4, (hidden_size,), jnp.float32,
                                  -bound_rnn, bound_rnn)
        params["rnn"].append((w_ih, w_hh, b_ih, b_hh))

    fc_in = num_words * hidden_size * num_layers
    bound_fc = 1.0 / jnp.sqrt(fc_in)
    key, k1, k2 = jax.random.split(key, 3)
    w_fc = jax.random.uniform(k1, (output_size, fc_in), jnp.float32,
                              -bound_fc, bound_fc)
    b_fc = jax.random.uniform(k2, (output_size,), jnp.float32,
                              -bound_fc, bound_fc)
    params["fc"] = (w_fc, b_fc)
    return params


# ---------------------------------------------------------------------------

if __name__ == "__main__":
    input_size = 16
    hidden_size = 32
    num_layers = 2
    output_size = 10
    num_words = 8
    batch = 2
    seq_len = 8   # must be >= num_words

    key = jax.random.PRNGKey(0)
    key, pkey, xkey = jax.random.split(key, 3)
    params = init_params(pkey, input_size, hidden_size, num_layers,
                         output_size, num_words)
    x = jax.random.normal(xkey, (batch, seq_len, input_size), jnp.float32)

    plan = prepare_params(params, num_words)          # pad/transpose/bf16 once
    out = rnn_model_forward(x, plan)
    out = jax.block_until_ready(out)

    assert out.shape == (batch, output_size)
    assert bool(jnp.all(jnp.isfinite(out)))

    # Reference is pure f32; the kernel uses bf16 MXU operands (f32 accumulate /
    # bias / tanh), so tolerance is set for bf16-matmul error (~1e-3 here).
    ref = rnn_model_reference(x, params, hidden_size, num_layers, num_words)
    max_err = float(jnp.max(jnp.abs(out - ref)))
    assert bool(jnp.allclose(out, ref, atol=2e-2, rtol=2e-2)), (
        f"mismatch vs pure-JAX reference, max abs err = {max_err}")

    print("KERNEL_OK")
</pallas_src>

<mosaic_0001>
module attributes {stable_mosaic.version = 11 : i64} {
  func.func @kernel(%arg0: memref<64x128xbf16, #tpu.memory_space<vmem>>, %arg1: memref<128x128xbf16, #tpu.memory_space<vmem>>, %arg2: memref<128x128xbf16, #tpu.memory_space<vmem>>, %arg3: memref<1x128xf32, #tpu.memory_space<vmem>>, %arg4: memref<128x128xbf16, #tpu.memory_space<vmem>>, %arg5: memref<128x128xbf16, #tpu.memory_space<vmem>>, %arg6: memref<1x128xf32, #tpu.memory_space<vmem>>, %arg7: memref<8x128x128xbf16, #tpu.memory_space<vmem>>, %arg8: memref<1x128xf32, #tpu.memory_space<vmem>>, %arg9: memref<8x128xf32, #tpu.memory_space<vmem>>, %arg10: memref<64x128xf32, #tpu.memory_space<vmem>>) attributes {dimension_semantics = [], scalar_prefetch = 0 : i64, scratch_operands = 1 : i64, tpu.core_type = #tpu.core_type<tc>} {
    %c0 = arith.constant 0 : index
    %c0_0 = arith.constant 0 : index
    %0 = vector.load %arg1[%c0, %c0_0] : memref<128x128xbf16, #tpu.memory_space<vmem>>, vector<128x128xbf16>
    %c0_1 = arith.constant 0 : index
    %c0_2 = arith.constant 0 : index
    %1 = vector.load %arg4[%c0_1, %c0_2] : memref<128x128xbf16, #tpu.memory_space<vmem>>, vector<128x128xbf16>
    %c0_3 = arith.constant 0 : index
    %c0_4 = arith.constant 0 : index
    %2 = vector.load %arg2[%c0_3, %c0_4] : memref<128x128xbf16, #tpu.memory_space<vmem>>, vector<128x128xbf16>
    %c0_5 = arith.constant 0 : index
    %c0_6 = arith.constant 0 : index
    %3 = vector.load %arg5[%c0_5, %c0_6] : memref<128x128xbf16, #tpu.memory_space<vmem>>, vector<128x128xbf16>
    %c0_7 = arith.constant 0 : index
    %c0_8 = arith.constant 0 : index
    %4 = vector.load %arg3[%c0_7, %c0_8] : memref<1x128xf32, #tpu.memory_space<vmem>>, vector<1x128xf32>
    %c0_9 = arith.constant 0 : index
    %c0_10 = arith.constant 0 : index
    %5 = vector.load %arg6[%c0_9, %c0_10] : memref<1x128xf32, #tpu.memory_space<vmem>>, vector<1x128xf32>
    %c0_11 = arith.constant 0 : index
    %c0_12 = arith.constant 0 : index
    %6 = vector.load %arg0[%c0_11, %c0_12] : memref<64x128xbf16, #tpu.memory_space<vmem>>, vector<64x128xbf16>
    %cst = arith.constant dense<0.000000e+00> : vector<64x128xf32>
    %7 = tpu.matmul %6, %0, %cst {dimension_numbers = #tpu.dot_dimension_numbers<[1], [0], [0], [1], [0, 0, 1, 1], [], []>} : vector<64x128xbf16>, vector<128x128xbf16>, vector<64x128xf32> -> vector<64x128xf32>
    %8 = vector.broadcast %4 : vector<1x128xf32> to vector<64x128xf32>
    %9 = arith.addf %7, %8 : vector<64x128xf32>
    %c0_13 = arith.constant 0 : index
    %c0_14 = arith.constant 0 : index
    %10 = vector.load %arg10[%c0_13, %c0_14] : memref<64x128xf32, #tpu.memory_space<vmem>>, vector<64x128xf32>
    tpu.vector_store %arg10[%c0_13, %c0_14], %9 {strides = array<i32>} : memref<64x128xf32, #tpu.memory_space<vmem>>, vector<64x128xf32>,
    %cst_15 = arith.constant 0.000000e+00 : f32
    %11 = vector.broadcast %cst_15 : f32 to vector<8x128xf32>
    %cst_16 = arith.constant 0.000000e+00 : f32
    %12 = vector.broadcast %cst_16 : f32 to vector<8x128xf32>
    %cst_17 = arith.constant 0.000000e+00 : f32
    %13 = vector.broadcast %cst_17 : f32 to vector<8x128xf32>
    %c0_18 = arith.constant 0 : index
    %c0_19 = arith.constant 0 : index
    %14 = vector.load %arg10[%c0_18, %c0_19] : memref<64x128xf32, #tpu.memory_space<vmem>>, vector<8x128xf32>
    %15 = arith.truncf %11 : vector<8x128xf32> to vector<8x128xbf16>
    %cst_20 = arith.constant dense<0.000000e+00> : vector<8x128xf32>
    %16 = tpu.matmul %15, %2, %cst_20 {dimension_numbers = #tpu.dot_dimension_numbers<[1], [0], [0], [1], [0, 0, 1, 1], [], []>} : vector<8x128xbf16>, vector<128x128xbf16>, vector<8x128xf32> -> vector<8x128xf32>
    %17 = arith.addf %14, %16 : vector<8x128xf32>
    %18 = math.tanh %17 : vector<8x128xf32>
    %c8 = arith.constant 8 : index
    %c0_21 = arith.constant 0 : index
    %19 = vector.load %arg10[%c8, %c0_21] : memref<64x128xf32, #tpu.memory_space<vmem>>, vector<8x128xf32>
    %20 = arith.truncf %18 : vector<8x128xf32> to vector<8x128xbf16>
    %cst_22 = arith.constant dense<0.000000e+00> : vector<8x128xf32>
    %21 = tpu.matmul %20, %2, %cst_22 {dimension_numbers = #tpu.dot_dimension_numbers<[1], [0], [0], [1], [0, 0, 1, 1], [], []>} : vector<8x128xbf16>, vector<128x128xbf16>, vector<8x128xf32> -> vector<8x128xf32>
    %22 = arith.addf %19, %21 : vector<8x128xf32>
    %23 = math.tanh %22 : vector<8x128xf32>
    %24 = arith.truncf %18 : vector<8x128xf32> to vector<8x128xbf16>
    %cst_23 = arith.constant dense<0.000000e+00> : vector<8x128xf32>
    %25 = tpu.matmul %24, %1, %cst_23 {dimension_numbers = #tpu.dot_dimension_numbers<[1], [0], [0], [1], [0, 0, 1, 1], [], []>} : vector<8x128xbf16>, vector<128x128xbf16>, vector<8x128xf32> -> vector<8x128xf32>
    %26 = vector.broadcast %5 : vector<1x128xf32> to vector<8x128xf32>
    %27 = arith.addf %25, %26 : vector<8x128xf32>
    %28 = arith.truncf %12 : vector<8x128xf32> to vector<8x128xbf16>
    %cst_24 = arith.constant dense<0.000000e+00> : vector<8x128xf32>
    %29 = tpu.matmul %28, %3, %cst_24 {dimension_numbers = #tpu.dot_dimension_numbers<[1], [0], [0], [1], [0, 0, 1, 1], [], []>} : vector<8x128xbf16>, vector<128x128xbf16>, vector<8x128xf32> -> vector<8x128xf32>
    %30 = arith.addf %27, %29 : vector<8x128xf32>
    %31 = math.tanh %30 : vector<8x128xf32>
    %32 = arith.truncf %31 : vector<8x128xf32> to vector<8x128xbf16>
    %c0_25 = arith.constant 0 : index
    %c0_26 = arith.constant 0 : index
    %c0_27 = arith.constant 0 : index
    %33 = vector.load %arg7[%c0_25, %c0_26, %c0_27] : memref<8x128x128xbf16, #tpu.memory_space<vmem>>, vector<1x128x128xbf16>
    %34 = vector.shape_cast %33 : vector<1x128x128xbf16> to vector<128x128xbf16>
    %cst_28 = arith.constant dense<0.000000e+00> : vector<8x128xf32>
    %35 = tpu.matmul %32, %34, %cst_28 {dimension_numbers = #tpu.dot_dimension_numbers<[1], [0], [0], [1], [0, 0, 1, 1], [], []>} : vector<8x128xbf16>, vector<128x128xbf16>, vector<8x128xf32> -> vector<8x128xf32>
    %36 = arith.addf %13, %35 : vector<8x128xf32>
    %c16 = arith.constant 16 : index
    %c0_29 = arith.constant 0 : index
    %37 = vector.load %arg10[%c16, %c0_29] : memref<64x128xf32, #tpu.memory_space<vmem>>, vector<8x128xf32>
    %38 = arith.truncf %23 : vector<8x128xf32> to vector<8x128xbf16>
    %cst_30 = arith.constant dense<0.000000e+00> : vector<8x128xf32>
    %39 = tpu.matmul %38, %2, %cst_30 {dimension_numbers = #tpu.dot_dimension_numbers<[1], [0], [0], [1], [0, 0, 1, 1], [], []>} : vector<8x128xbf16>, vector<128x128xbf16>, vector<8x128xf32> -> vector<8x128xf32>
    %40 = arith.addf %37, %39 : vector<8x128xf32>
    %41 = math.tanh %40 : vector<8x128xf32>
    %42 = arith.truncf %23 : vector<8x128xf32> to vector<8x128xbf16>
    %cst_31 = arith.constant dense<0.000000e+00> : vector<8x128xf32>
    %43 = tpu.matmul %42, %1, %cst_31 {dimension_numbers = #tpu.dot_dimension_numbers<[1], [0], [0], [1], [0, 0, 1, 1], [], []>} : vector<8x128xbf16>, vector<128x128xbf16>, vector<8x128xf32> -> vector<8x128xf32>
    %44 = vector.broadcast %5 : vector<1x128xf32> to vector<8x128xf32>
    %45 = arith.addf %43, %44 : vector<8x128xf32>
    %46 = arith.truncf %31 : vector<8x128xf32> to vector<8x128xbf16>
    %cst_32 = arith.constant dense<0.000000e+00> : vector<8x128xf32>
    %47 = tpu.matmul %46, %3, %cst_32 {dimension_numbers = #tpu.dot_dimension_numbers<[1], [0], [0], [1], [0, 0, 1, 1], [], []>} : vector<8x128xbf16>, vector<128x128xbf16>, vector<8x128xf32> -> vector<8x128xf32>
    %48 = arith.addf %45, %47 : vector<8x128xf32>
    %49 = math.tanh %48 : vector<8x128xf32>
    %50 = arith.truncf %49 : vector<8x128xf32> to vector<8x128xbf16>
    %c1 = arith.constant 1 : index
    %c0_33 = arith.constant 0 : index
    %c0_34 = arith.constant 0 : index
    %51 = vector.load %arg7[%c1, %c0_33, %c0_34] : memref<8x128x128xbf16, #tpu.memory_space<vmem>>, vector<1x128x128xbf16>
    %52 = vector.shape_cast %51 : vector<1x128x128xbf16> to vector<128x128xbf16>
    %cst_35 = arith.constant dense<0.000000e+00> : vector<8x128xf32>
    %53 = tpu.matmul %50, %52, %cst_35 {dimension_numbers = #tpu.dot_dimension_numbers<[1], [0], [0], [1], [0, 0, 1, 1], [], []>} : vector<8x128xbf16>, vector<128x128xbf16>, vector<8x128xf32> -> vector<8x128xf32>
    %54 = arith.addf %36, %53 : vector<8x128xf32>
    %c24 = arith.constant 24 : index
    %c0_36 = arith.constant 0 : index
    %55 = vector.load %arg10[%c24, %c0_36] : memref<64x128xf32, #tpu.memory_space<vmem>>, vector<8x128xf32>
    %56 = arith.truncf %41 : vector<8x128xf32> to vector<8x128xbf16>
    %cst_37 = arith.constant dense<0.000000e+00> : vector<8x128xf32>
    %57 = tpu.matmul %56, %2, %cst_37 {dimension_numbers = #tpu.dot_dimension_numbers<[1], [0], [0], [1], [0, 0, 1, 1], [], []>} : vector<8x128xbf16>, vector<128x128xbf16>, vector<8x128xf32> -> vector<8x128xf32>
    %58 = arith.addf %55, %57 : vector<8x128xf32>
    %59 = math.tanh %58 : vector<8x128xf32>
    %60 = arith.truncf %41 : vector<8x128xf32> to vector<8x128xbf16>
    %cst_38 = arith.constant dense<0.000000e+00> : vector<8x128xf32>
    %61 = tpu.matmul %60, %1, %cst_38 {dimension_numbers = #tpu.dot_dimension_numbers<[1], [0], [0], [1], [0, 0, 1, 1], [], []>} : vector<8x128xbf16>, vector<128x128xbf16>, vector<8x128xf32> -> vector<8x128xf32>
    %62 = vector.broadcast %5 : vector<1x128xf32> to vector<8x128xf32>
    %63 = arith.addf %61, %62 : vector<8x128xf32>
    %64 = arith.truncf %49 : vector<8x128xf32> to vector<8x128xbf16>
    %cst_39 = arith.constant dense<0.000000e+00> : vector<8x128xf32>
    %65 = tpu.matmul %64, %3, %cst_39 {dimension_numbers = #tpu.dot_dimension_numbers<[1], [0], [0], [1], [0, 0, 1, 1], [], []>} : vector<8x128xbf16>, vector<128x128xbf16>, vector<8x128xf32> -> vector<8x128xf32>
    %66 = arith.addf %63, %65 : vector<8x128xf32>
    %67 = math.tanh %66 : vector<8x128xf32>
    %68 = arith.truncf %67 : vector<8x128xf32> to vector<8x128xbf16>
    %c2 = arith.constant 2 : index
    %c0_40 = arith.constant 0 : index
    %c0_41 = arith.constant 0 : index
    %69 = vector.load %arg7[%c2, %c0_40, %c0_41] : memref<8x128x128xbf16, #tpu.memory_space<vmem>>, vector<1x128x128xbf16>
    %70 = vector.shape_cast %69 : vector<1x128x128xbf16> to vector<128x128xbf16>
    %cst_42 = arith.constant dense<0.000000e+00> : vector<8x128xf32>
    %71 = tpu.matmul %68, %70, %cst_42 {dimension_numbers = #tpu.dot_dimension_numbers<[1], [0], [0], [1], [0, 0, 1, 1], [], []>} : vector<8x128xbf16>, vector<128x128xbf16>, vector<8x128xf32> -> vector<8x128xf32>
    %72 = arith.addf %54, %71 : vector<8x128xf32>
    %c32 = arith.constant 32 : index
    %c0_43 = arith.constant 0 : index
    %73 = vector.load %arg10[%c32, %c0_43] : memref<64x128xf32, #tpu.memory_space<vmem>>, vector<8x128xf32>
    %74 = arith.truncf %59 : vector<8x128xf32> to vector<8x128xbf16>
    %cst_44 = arith.constant dense<0.000000e+00> : vector<8x128xf32>
    %75 = tpu.matmul %74, %2, %cst_44 {dimension_numbers = #tpu.dot_dimension_numbers<[1], [0], [0], [1], [0, 0, 1, 1], [], []>} : vector<8x128xbf16>, vector<128x128xbf16>, vector<8x128xf32> -> vector<8x128xf32>
    %76 = arith.addf %73, %75 : vector<8x128xf32>
    %77 = math.tanh %76 : vector<8x128xf32>
    %78 = arith.truncf %59 : vector<8x128xf32> to vector<8x128xbf16>
    %cst_45 = arith.constant dense<0.000000e+00> : vector<8x128xf32>
    %79 = tpu.matmul %78, %1, %cst_45 {dimension_numbers = #tpu.dot_dimension_numbers<[1], [0], [0], [1], [0, 0, 1, 1], [], []>} : vector<8x128xbf16>, vector<128x128xbf16>, vector<8x128xf32> -> vector<8x128xf32>
    %80 = vector.broadcast %5 : vector<1x128xf32> to vector<8x128xf32>
    %81 = arith.addf %79, %80 : vector<8x128xf32>
    %82 = arith.truncf %67 : vector<8x128xf32> to vector<8x128xbf16>
    %cst_46 = arith.constant dense<0.000000e+00> : vector<8x128xf32>
    %83 = tpu.matmul %82, %3, %cst_46 {dimension_numbers = #tpu.dot_dimension_numbers<[1], [0], [0], [1], [0, 0, 1, 1], [], []>} : vector<8x128xbf16>, vector<128x128xbf16>, vector<8x128xf32> -> vector<8x128xf32>
    %84 = arith.addf %81, %83 : vector<8x128xf32>
    %85 = math.tanh %84 : vector<8x128xf32>
    %86 = arith.truncf %85 : vector<8x128xf32> to vector<8x128xbf16>
    %c3 = arith.constant 3 : index
    %c0_47 = arith.constant 0 : index
    %c0_48 = arith.constant 0 : index
    %87 = vector.load %arg7[%c3, %c0_47, %c0_48] : memref<8x128x128xbf16, #tpu.memory_space<vmem>>, vector<1x128x128xbf16>
    %88 = vector.shape_cast %87 : vector<1x128x128xbf16> to vector<128x128xbf16>
    %cst_49 = arith.constant dense<0.000000e+00> : vector<8x128xf32>
    %89 = tpu.matmul %86, %88, %cst_49 {dimension_numbers = #tpu.dot_dimension_numbers<[1], [0], [0], [1], [0, 0, 1, 1], [], []>} : vector<8x128xbf16>, vector<128x128xbf16>, vector<8x128xf32> -> vector<8x128xf32>
    %90 = arith.addf %72, %89 : vector<8x128xf32>
    %c40 = arith.constant 40 : index
    %c0_50 = arith.constant 0 : index
    %91 = vector.load %arg10[%c40, %c0_50] : memref<64x128xf32, #tpu.memory_space<vmem>>, vector<8x128xf32>
    %92 = arith.truncf %77 : vector<8x128xf32> to vector<8x128xbf16>
    %cst_51 = arith.constant dense<0.000000e+00> : vector<8x128xf32>
    %93 = tpu.matmul %92, %2, %cst_51 {dimension_numbers = #tpu.dot_dimension_numbers<[1], [0], [0], [1], [0, 0, 1, 1], [], []>} : vector<8x128xbf16>, vector<128x128xbf16>, vector<8x128xf32> -> vector<8x128xf32>
    %94 = arith.addf %91, %93 : vector<8x128xf32>
    %95 = math.tanh %94 : vector<8x128xf32>
    %96 = arith.truncf %77 : vector<8x128xf32> to vector<8x128xbf16>
    %cst_52 = arith.constant dense<0.000000e+00> : vector<8x128xf32>
    %97 = tpu.matmul %96, %1, %cst_52 {dimension_numbers = #tpu.dot_dimension_numbers<[1], [0], [0], [1], [0, 0, 1, 1], [], []>} : vector<8x128xbf16>, vector<128x128xbf16>, vector<8x128xf32> -> vector<8x128xf32>
    %98 = vector.broadcast %5 : vector<1x128xf32> to vector<8x128xf32>
    %99 = arith.addf %97, %98 : vector<8x128xf32>
    %100 = arith.truncf %85 : vector<8x128xf32> to vector<8x128xbf16>
    %cst_53 = arith.constant dense<0.000000e+00> : vector<8x128xf32>
    %101 = tpu.matmul %100, %3, %cst_53 {dimension_numbers = #tpu.dot_dimension_numbers<[1], [0], [0], [1], [0, 0, 1, 1], [], []>} : vector<8x128xbf16>, vector<128x128xbf16>, vector<8x128xf32> -> vector<8x128xf32>
    %102 = arith.addf %99, %101 : vector<8x128xf32>
    %103 = math.tanh %102 : vector<8x128xf32>
    %104 = arith.truncf %103 : vector<8x128xf32> to vector<8x128xbf16>
    %c4 = arith.constant 4 : index
    %c0_54 = arith.constant 0 : index
    %c0_55 = arith.constant 0 : index
    %105 = vector.load %arg7[%c4, %c0_54, %c0_55] : memref<8x128x128xbf16, #tpu.memory_space<vmem>>, vector<1x128x128xbf16>
    %106 = vector.shape_cast %105 : vector<1x128x128xbf16> to vector<128x128xbf16>
    %cst_56 = arith.constant dense<0.000000e+00> : vector<8x128xf32>
    %107 = tpu.matmul %104, %106, %cst_56 {dimension_numbers = #tpu.dot_dimension_numbers<[1], [0], [0], [1], [0, 0, 1, 1], [], []>} : vector<8x128xbf16>, vector<128x128xbf16>, vector<8x128xf32> -> vector<8x128xf32>
    %108 = arith.addf %90, %107 : vector<8x128xf32>
    %c48 = arith.constant 48 : index
    %c0_57 = arith.constant 0 : index
    %109 = vector.load %arg10[%c48, %c0_57] : memref<64x128xf32, #tpu.memory_space<vmem>>, vector<8x128xf32>
    %110 = arith.truncf %95 : vector<8x128xf32> to vector<8x128xbf16>
    %cst_58 = arith.constant dense<0.000000e+00> : vector<8x128xf32>
    %111 = tpu.matmul %110, %2, %cst_58 {dimension_numbers = #tpu.dot_dimension_numbers<[1], [0], [0], [1], [0, 0, 1, 1], [], []>} : vector<8x128xbf16>, vector<128x128xbf16>, vector<8x128xf32> -> vector<8x128xf32>
    %112 = arith.addf %109, %111 : vector<8x128xf32>
    %113 = math.tanh %112 : vector<8x128xf32>
    %114 = arith.truncf %95 : vector<8x128xf32> to vector<8x128xbf16>
    %cst_59 = arith.constant dense<0.000000e+00> : vector<8x128xf32>
    %115 = tpu.matmul %114, %1, %cst_59 {dimension_numbers = #tpu.dot_dimension_numbers<[1], [0], [0], [1], [0, 0, 1, 1], [], []>} : vector<8x128xbf16>, vector<128x128xbf16>, vector<8x128xf32> -> vector<8x128xf32>
    %116 = vector.broadcast %5 : vector<1x128xf32> to vector<8x128xf32>
    %117 = arith.addf %115, %116 : vector<8x128xf32>
    %118 = arith.truncf %103 : vector<8x128xf32> to vector<8x128xbf16>
    %cst_60 = arith.constant dense<0.000000e+00> : vector<8x128xf32>
    %119 = tpu.matmul %118, %3, %cst_60 {dimension_numbers = #tpu.dot_dimension_numbers<[1], [0], [0], [1], [0, 0, 1, 1], [], []>} : vector<8x128xbf16>, vector<128x128xbf16>, vector<8x128xf32> -> vector<8x128xf32>
    %120 = arith.addf %117, %119 : vector<8x128xf32>
    %121 = math.tanh %120 : vector<8x128xf32>
    %122 = arith.truncf %121 : vector<8x128xf32> to vector<8x128xbf16>
    %c5 = arith.constant 5 : index
    %c0_61 = arith.constant 0 : index
    %c0_62 = arith.constant 0 : index
    %123 = vector.load %arg7[%c5, %c0_61, %c0_62] : memref<8x128x128xbf16, #tpu.memory_space<vmem>>, vector<1x128x128xbf16>
    %124 = vector.shape_cast %123 : vector<1x128x128xbf16> to vector<128x128xbf16>
    %cst_63 = arith.constant dense<0.000000e+00> : vector<8x128xf32>
    %125 = tpu.matmul %122, %124, %cst_63 {dimension_numbers = #tpu.dot_dimension_numbers<[1], [0], [0], [1], [0, 0, 1, 1], [], []>} : vector<8x128xbf16>, vector<128x128xbf16>, vector<8x128xf32> -> vector<8x128xf32>
    %126 = arith.addf %108, %125 : vector<8x128xf32>
    %c56 = arith.constant 56 : index
    %c0_64 = arith.constant 0 : index
    %127 = vector.load %arg10[%c56, %c0_64] : memref<64x128xf32, #tpu.memory_space<vmem>>, vector<8x128xf32>
    %128 = arith.truncf %113 : vector<8x128xf32> to vector<8x128xbf16>
    %cst_65 = arith.constant dense<0.000000e+00> : vector<8x128xf32>
    %129 = tpu.matmul %128, %2, %cst_65 {dimension_numbers = #tpu.dot_dimension_numbers<[1], [0], [0], [1], [0, 0, 1, 1], [], []>} : vector<8x128xbf16>, vector<128x128xbf16>, vector<8x128xf32> -> vector<8x128xf32>
    %130 = arith.addf %127, %129 : vector<8x128xf32>
    %131 = math.tanh %130 : vector<8x128xf32>
    %132 = arith.truncf %113 : vector<8x128xf32> to vector<8x128xbf16>
    %cst_66 = arith.constant dense<0.000000e+00> : vector<8x128xf32>
    %133 = tpu.matmul %132, %1, %cst_66 {dimension_numbers = #tpu.dot_dimension_numbers<[1], [0], [0], [1], [0, 0, 1, 1], [], []>} : vector<8x128xbf16>, vector<128x128xbf16>, vector<8x128xf32> -> vector<8x128xf32>
    %134 = vector.broadcast %5 : vector<1x128xf32> to vector<8x128xf32>
    %135 = arith.addf %133, %134 : vector<8x128xf32>
    %136 = arith.truncf %121 : vector<8x128xf32> to vector<8x128xbf16>
    %cst_67 = arith.constant dense<0.000000e+00> : vector<8x128xf32>
    %137 = tpu.matmul %136, %3, %cst_67 {dimension_numbers = #tpu.dot_dimension_numbers<[1], [0], [0], [1], [0, 0, 1, 1], [], []>} : vector<8x128xbf16>, vector<128x128xbf16>, vector<8x128xf32> -> vector<8x128xf32>
    %138 = arith.addf %135, %137 : vector<8x128xf32>
    %139 = math.tanh %138 : vector<8x128xf32>
    %140 = arith.truncf %139 : vector<8x128xf32> to vector<8x128xbf16>
    %c6 = arith.constant 6 : index
    %c0_68 = arith.constant 0 : index
    %c0_69 = arith.constant 0 : index
    %141 = vector.load %arg7[%c6, %c0_68, %c0_69] : memref<8x128x128xbf16, #tpu.memory_space<vmem>>, vector<1x128x128xbf16>
    %142 = vector.shape_cast %141 : vector<1x128x128xbf16> to vector<128x128xbf16>
    %cst_70 = arith.constant dense<0.000000e+00> : vector<8x128xf32>
    %143 = tpu.matmul %140, %142, %cst_70 {dimension_numbers = #tpu.dot_dimension_numbers<[1], [0], [0], [1], [0, 0, 1, 1], [], []>} : vector<8x128xbf16>, vector<128x128xbf16>, vector<8x128xf32> -> vector<8x128xf32>
    %144 = arith.addf %126, %143 : vector<8x128xf32>
    %145 = arith.truncf %131 : vector<8x128xf32> to vector<8x128xbf16>
    %cst_71 = arith.constant dense<0.000000e+00> : vector<8x128xf32>
    %146 = tpu.matmul %145, %1, %cst_71 {dimension_numbers = #tpu.dot_dimension_numbers<[1], [0], [0], [1], [0, 0, 1, 1], [], []>} : vector<8x128xbf16>, vector<128x128xbf16>, vector<8x128xf32> -> vector<8x128xf32>
    %147 = vector.broadcast %5 : vector<1x128xf32> to vector<8x128xf32>
    %148 = arith.addf %146, %147 : vector<8x128xf32>
    %149 = arith.truncf %139 : vector<8x128xf32> to vector<8x128xbf16>
    %cst_72 = arith.constant dense<0.000000e+00> : vector<8x128xf32>
    %150 = tpu.matmul %149, %3, %cst_72 {dimension_numbers = #tpu.dot_dimension_numbers<[1], [0], [0], [1], [0, 0, 1, 1], [], []>} : vector<8x128xbf16>, vector<128x128xbf16>, vector<8x128xf32> -> vector<8x128xf32>
    %151 = arith.addf %148, %150 : vector<8x128xf32>
    %152 = math.tanh %151 : vector<8x128xf32>
    %153 = arith.truncf %152 : vector<8x128xf32> to vector<8x128xbf16>
    %c7 = arith.constant 7 : index
    %c0_73 = arith.constant 0 : index
    %c0_74 = arith.constant 0 : index
    %154 = vector.load %arg7[%c7, %c0_73, %c0_74] : memref<8x128x128xbf16, #tpu.memory_space<vmem>>, vector<1x128x128xbf16>
    %155 = vector.shape_cast %154 : vector<1x128x128xbf16> to vector<128x128xbf16>
    %cst_75 = arith.constant dense<0.000000e+00> : vector<8x128xf32>
    %156 = tpu.matmul %153, %155, %cst_75 {dimension_numbers = #tpu.dot_dimension_numbers<[1], [0], [0], [1], [0, 0, 1, 1], [], []>} : vector<8x128xbf16>, vector<128x128xbf16>, vector<8x128xf32> -> vector<8x128xf32>
    %157 = arith.addf %144, %156 : vector<8x128xf32>
    %c0_76 = arith.constant 0 : index
    %c0_77 = arith.constant 0 : index
    %158 = vector.load %arg8[%c0_76, %c0_77] : memref<1x128xf32, #tpu.memory_space<vmem>>, vector<1x128xf32>
    %159 = vector.broadcast %158 : vector<1x128xf32> to vector<8x128xf32>
    %160 = arith.addf %157, %159 : vector<8x128xf32>
    %c0_78 = arith.constant 0 : index
    %c0_79 = arith.constant 0 : index
    %161 = vector.load %arg9[%c0_78, %c0_79] : memref<8x128xf32, #tpu.memory_space<vmem>>, vector<8x128xf32>
    tpu.vector_store %arg9[%c0_78, %c0_79], %160 {strides = array<i32>} : memref<8x128xf32, #tpu.memory_space<vmem>>, vector<8x128xf32>,
    return
  }
}

</mosaic_0001>

<llo_original>
// kernel: tpu_custom_call.1
$region0: #{tpu_custom_call.1}
  #allocation0 [shape = 'u32[]', space=smem, size = 0x4, offset = 0x4, fixed_abs, tag = 'smem constant byte address 0x4 - core index']
  #allocation1 [shape = 'u32[72,128]{1,0:T(1,128)}', space=vmem, size = 0x9000, scoped, tag = 'internal scratch']
  #allocation2 [shape = 'f32[64,128]{1,0:T(8,128)}', space=vmem, size = 0x8000, scoped, tag = 'scratch operand']
  %s0 = inlined_call_operand.hbm [shape: bf16[64,128], index: 0, kind: input, shape index: {}]
  %s1 = inlined_call_operand.hbm [shape: bf16[128,128], index: 1, kind: input, shape index: {}]
  %s2 = inlined_call_operand.hbm [shape: bf16[128,128], index: 2, kind: input, shape index: {}]
  %s3 = inlined_call_operand.vmem [shape: f32[1,128], index: 3, kind: input, shape index: {}]
  %s4 = inlined_call_operand.hbm [shape: bf16[128,128], index: 4, kind: input, shape index: {}]
  %s5 = inlined_call_operand.hbm [shape: bf16[128,128], index: 5, kind: input, shape index: {}]
  %s6 = inlined_call_operand.vmem [shape: f32[1,128], index: 6, kind: input, shape index: {}]
  %s7 = inlined_call_operand.hbm [shape: bf16[8,128,128], index: 7, kind: input, shape index: {}]
  %s8 = inlined_call_operand.vmem [shape: f32[1,128], index: 8, kind: input, shape index: {}]
  %s9 = inlined_call_operand.hbm [shape: f32[8,128], index: 9, kind: output, shape index: {}]
  %s10 = sld [smem:[#allocation0]]
  $region70: #{tpu_custom_call.1} parent=0
    _
  %s12 = ssub.s32 1, %s10
  %s13 = scalar_select 0, %s12, %s10
  $region1: #{tpu_custom_call.1} parent=0
    #allocation3 [shape = 'u8[16384]{0}', space=vmem, size = 0x4000, scoped, tag = 'input window, operand 0, single buffered']
    #allocation4 [shape = 's32[1]{0}', space=sflag, size = 0x4, scoped, tag = 'scoped memory for tpu_custom_call.1']
    #allocation5 [shape = 's32[1]{0}', space=sflag, size = 0x4, scoped, tag = 'scoped memory for tpu_custom_call.1']
    #allocation6 [shape = 'u8[32768]{0}', space=vmem, size = 0x8000, scoped, tag = 'input window, operand 1, single buffered']
    #allocation7 [shape = 's32[1]{0}', space=sflag, size = 0x4, scoped, tag = 'scoped memory for tpu_custom_call.1']
    #allocation8 [shape = 'u8[32768]{0}', space=vmem, size = 0x8000, scoped, tag = 'input window, operand 2, single buffered']
    #allocation9 [shape = 'u8[32768]{0}', space=vmem, size = 0x8000, scoped, tag = 'input window, operand 4, single buffered']
    #allocation10 [shape = 's32[1]{0}', space=sflag, size = 0x4, scoped, tag = 'scoped memory for tpu_custom_call.1']
    #allocation11 [shape = 'u8[32768]{0}', space=vmem, size = 0x8000, scoped, tag = 'input window, operand 5, single buffered']
    #allocation12 [shape = 'u8[262144]{0}', space=vmem, size = 0x40000, scoped, tag = 'input window, operand 7, single buffered']
    #allocation13 [shape = 's32[1]{0}', space=sflag, size = 0x4, scoped, tag = 'scoped memory for tpu_custom_call.1']
    #allocation14 [shape = 'u8[4096]{0}', space=vmem, size = 0x1000, scoped, tag = 'output window, operand 0, single buffered']
    %14 = vsyncpa [#allocation4], 0
    %15 = vsyncpa [#allocation7], 0
    %16 = vsyncpa [#allocation10], 0
    %17 = vsyncpa [#allocation13], 0
    %18 = vsyncpa [#allocation5], 0
    // Predicated region
    $region2: #{tpu_custom_call.1} parent=1 // pred_check
      _
    $region3: #{tpu_custom_call.1} parent=1 // pred_check_branch
      %20 = sbr.rel (0) target = $region5
    $region4: #{tpu_custom_call.1} parent=1 // pred_region
      %22 = vsyncadd [#allocation4], 0
      %s23 = sshll.u32 %s0, 4
      %s24 = int_to_ptr.hbm [resolvable:$true] %s23
      %s25 = sshll.u32 [#allocation3], 4
      %s26 = int_to_ptr.vmem [resolvable:$true] %s25
      %31 = dma.hbm_to_vmem [thread:$0]  %s24, 512, %s26, [#allocation4], 64, 64, 4
    $region5: #{tpu_custom_call.1} parent=1 // pred_fallthru
      _
    // Predicated region
    $region6: #{tpu_custom_call.1} parent=1 // pred_check
      _
    $region7: #{tpu_custom_call.1} parent=1 // pred_check_branch
      %33 = sbr.rel (0) target = $region9
    $region8: #{tpu_custom_call.1} parent=1 // pred_region
      %35 = vsyncadd [#allocation7], 0
      %s36 = sshll.u32 %s1, 4
      %s37 = int_to_ptr.hbm [resolvable:$true] %s36
      %s38 = sshll.u32 [#allocation6], 4
      %s39 = int_to_ptr.vmem [resolvable:$true] %s38
      %44 = dma.hbm_to_vmem [thread:$0]  %s37, 1024, %s39, [#allocation7], 64, 64, 4
    $region9: #{tpu_custom_call.1} parent=1 // pred_fallthru
      _
    // Predicated region
    $region10: #{tpu_custom_call.1} parent=1 // pred_check
      _
    $region11: #{tpu_custom_call.1} parent=1 // pred_check_branch
      %46 = sbr.rel (0) target = $region13
    $region12: #{tpu_custom_call.1} parent=1 // pred_region
      %48 = vsyncadd [#allocation7], 0
      %s49 = sshll.u32 %s2, 4
      %s50 = int_to_ptr.hbm [resolvable:$true] %s49
      %s51 = sshll.u32 [#allocation8], 4
      %s52 = int_to_ptr.vmem [resolvable:$true] %s51
      %57 = dma.hbm_to_vmem [thread:$0]  %s50, 1024, %s52, [#allocation7], 64, 64, 4
    $region13: #{tpu_custom_call.1} parent=1 // pred_fallthru
      _
    // Predicated region
    $region14: #{tpu_custom_call.1} parent=1 // pred_check
      _
    $region15: #{tpu_custom_call.1} parent=1 // pred_check_branch
      %59 = sbr.rel (0) target = $region17
    $region16: #{tpu_custom_call.1} parent=1 // pred_region
      _
    $region17: #{tpu_custom_call.1} parent=1 // pred_fallthru
      _
    // Predicated region
    $region18: #{tpu_custom_call.1} parent=1 // pred_check
      _
    $region19: #{tpu_custom_call.1} parent=1 // pred_check_branch
      %61 = sbr.rel (0) target = $region21
    $region20: #{tpu_custom_call.1} parent=1 // pred_region
      %63 = vsyncadd [#allocation10], 0
      %s64 = sshll.u32 %s4, 4
      %s65 = int_to_ptr.hbm [resolvable:$true] %s64
      %s66 = sshll.u32 [#allocation9], 4
      %s67 = int_to_ptr.vmem [resolvable:$true] %s66
      %72 = dma.hbm_to_vmem [thread:$0]  %s65, 1024, %s67, [#allocation10], 64, 64, 4
    $region21: #{tpu_custom_call.1} parent=1 // pred_fallthru
      _
    // Predicated region
    $region22: #{tpu_custom_call.1} parent=1 // pred_check
      _
    $region23: #{tpu_custom_call.1} parent=1 // pred_check_branch
      %74 = sbr.rel (0) target = $region25
    $region24: #{tpu_custom_call.1} parent=1 // pred_region
      %76 = vsyncadd [#allocation10], 0
      %s77 = sshll.u32 %s5, 4
      %s78 = int_to_ptr.hbm [resolvable:$true] %s77
      %s79 = sshll.u32 [#allocation11], 4
      %s80 = int_to_ptr.vmem [resolvable:$true] %s79
      %85 = dma.hbm_to_vmem [thread:$0]  %s78, 1024, %s80, [#allocation10], 64, 64, 4
    $region25: #{tpu_custom_call.1} parent=1 // pred_fallthru
      _
    // Predicated region
    $region26: #{tpu_custom_call.1} parent=1 // pred_check
      _
    $region27: #{tpu_custom_call.1} parent=1 // pred_check_branch
      %87 = sbr.rel (0) target = $region29
    $region28: #{tpu_custom_call.1} parent=1 // pred_region
      _
    $region29: #{tpu_custom_call.1} parent=1 // pred_fallthru
      _
    // Predicated region
    $region30: #{tpu_custom_call.1} parent=1 // pred_check
      _
    $region31: #{tpu_custom_call.1} parent=1 // pred_check_branch
      %89 = sbr.rel (0) target = $region33
    $region32: #{tpu_custom_call.1} parent=1 // pred_region
      %91 = vsyncadd [#allocation13], 0
      %s92 = sshll.u32 %s7, 4
      %s93 = int_to_ptr.hbm [resolvable:$true] %s92
      %s94 = sshll.u32 [#allocation12], 4
      %s95 = int_to_ptr.vmem [resolvable:$true] %s94
      %100 = dma.hbm_to_vmem [thread:$0]  %s93, 8192, %s95, [#allocation13], 64, 64, 4
    $region33: #{tpu_custom_call.1} parent=1 // pred_fallthru
      _
    // Predicated region
    $region34: #{tpu_custom_call.1} parent=1 // pred_check
      _
    $region35: #{tpu_custom_call.1} parent=1 // pred_check_branch
      %102 = sbr.rel (0) target = $region37
    $region36: #{tpu_custom_call.1} parent=1 // pred_region
      _
    $region37: #{tpu_custom_call.1} parent=1 // pred_fallthru
      _
    // Predicated region
    $region38: #{tpu_custom_call.1} parent=1 // pred_check
      _
    $region39: #{tpu_custom_call.1} parent=1 // pred_check_branch
      %104 = sbr.rel (0) target = $region41
    $region40: #{tpu_custom_call.1} parent=1 // pred_region
      %106 = dma.done [#allocation4], 512
    $region41: #{tpu_custom_call.1} parent=1 // pred_fallthru
      _
    // Predicated region
    $region42: #{tpu_custom_call.1} parent=1 // pred_check
      _
    $region43: #{tpu_custom_call.1} parent=1 // pred_check_branch
      %108 = sbr.rel (0) target = $region45
    $region44: #{tpu_custom_call.1} parent=1 // pred_region
      %110 = dma.done [#allocation7], 1024
    $region45: #{tpu_custom_call.1} parent=1 // pred_fallthru
      _
    // Predicated region
    $region46: #{tpu_custom_call.1} parent=1 // pred_check
      _
    $region47: #{tpu_custom_call.1} parent=1 // pred_check_branch
      %112 = sbr.rel (0) target = $region49
    $region48: #{tpu_custom_call.1} parent=1 // pred_region
      %114 = dma.done [#allocation7], 1024
    $region49: #{tpu_custom_call.1} parent=1 // pred_fallthru
      _
    // Predicated region
    $region50: #{tpu_custom_call.1} parent=1 // pred_check
      _
    $region51: #{tpu_custom_call.1} parent=1 // pred_check_branch
      %116 = sbr.rel (0) target = $region53
    $region52: #{tpu_custom_call.1} parent=1 // pred_region
      %118 = dma.done [#allocation10], 1024
    $region53: #{tpu_custom_call.1} parent=1 // pred_fallthru
      _
    // Predicated region
    $region54: #{tpu_custom_call.1} parent=1 // pred_check
      _
    $region55: #{tpu_custom_call.1} parent=1 // pred_check_branch
      %120 = sbr.rel (0) target = $region57
    $region56: #{tpu_custom_call.1} parent=1 // pred_region
      %122 = dma.done [#allocation10], 1024
    $region57: #{tpu_custom_call.1} parent=1 // pred_fallthru
      _
    // Predicated region
    $region58: #{tpu_custom_call.1} parent=1 // pred_check
      _
    $region59: #{tpu_custom_call.1} parent=1 // pred_check_branch
      %124 = sbr.rel (0) target = $region61
    $region60: #{tpu_custom_call.1} parent=1 // pred_region
      %126 = dma.done [#allocation13], 8192
    $region61: #{tpu_custom_call.1} parent=1 // pred_fallthru
      _
    %v128 = vld [vmem:[#allocation6] sm:$0xf]
    %v129 = vld [vmem:[#allocation6 + $0x4] sm:$0xf]
    %v130 = vld [vmem:[#allocation6 + $0x8] sm:$0xf]
    %v131 = vld [vmem:[#allocation6 + $0xc] sm:$0xf]
    %v132 = vld [vmem:[#allocation6 + $0x10] sm:$0xf]
    %v133 = vld [vmem:[#allocation6 + $0x14] sm:$0xf]
    %v134 = vld [vmem:[#allocation6 + $0x18] sm:$0xf]
    %v135 = vld [vmem:[#allocation6 + $0x1c] sm:$0xf]
    %v136 = vld [vmem:[#allocation6 + $0x20] sm:$0xf]
    %v137 = vld [vmem:[#allocation6 + $0x24] sm:$0xf]
    %v138 = vld [vmem:[#allocation6 + $0x28] sm:$0xf]
    %v139 = vld [vmem:[#allocation6 + $0x2c] sm:$0xf]
    %v140 = vld [vmem:[#allocation6 + $0x30] sm:$0xf]
    %v141 = vld [vmem:[#allocation6 + $0x34] sm:$0xf]
    %v142 = vld [vmem:[#allocation6 + $0x38] sm:$0xf]
    %v143 = vld [vmem:[#allocation6 + $0x3c] sm:$0xf]
    %v144 = vld [vmem:[#allocation9] sm:$0xf]
    %v145 = vld [vmem:[#allocation9 + $0x4] sm:$0xf]
    %v146 = vld [vmem:[#allocation9 + $0x8] sm:$0xf]
    %v147 = vld [vmem:[#allocation9 + $0xc] sm:$0xf]
    %v148 = vld [vmem:[#allocation9 + $0x10] sm:$0xf]
    %v149 = vld [vmem:[#allocation9 + $0x14] sm:$0xf]
    %v150 = vld [vmem:[#allocation9 + $0x18] sm:$0xf]
    %v151 = vld [vmem:[#allocation9 + $0x1c] sm:$0xf]
    %v152 = vld [vmem:[#allocation9 + $0x20] sm:$0xf]
    %v153 = vld [vmem:[#allocation9 + $0x24] sm:$0xf]
    %v154 = vld [vmem:[#allocation9 + $0x28] sm:$0xf]
    %v155 = vld [vmem:[#allocation9 + $0x2c] sm:$0xf]
    %v156 = vld [vmem:[#allocation9 + $0x30] sm:$0xf]
    %v157 = vld [vmem:[#allocation9 + $0x34] sm:$0xf]
    %v158 = vld [vmem:[#allocation9 + $0x38] sm:$0xf]
    %v159 = vld [vmem:[#allocation9 + $0x3c] sm:$0xf]
    %v160 = vld [vmem:[#allocation8] sm:$0xf]
    %v161 = vld [vmem:[#allocation8 + $0x4] sm:$0xf]
    %v162 = vld [vmem:[#allocation8 + $0x8] sm:$0xf]
    %v163 = vld [vmem:[#allocation8 + $0xc] sm:$0xf]
    %v164 = vld [vmem:[#allocation8 + $0x10] sm:$0xf]
    %v165 = vld [vmem:[#allocation8 + $0x14] sm:$0xf]
    %v166 = vld [vmem:[#allocation8 + $0x18] sm:$0xf]
    %v167 = vld [vmem:[#allocation8 + $0x1c] sm:$0xf]
    %v168 = vld [vmem:[#allocation8 + $0x20] sm:$0xf]
    %v169 = vld [vmem:[#allocation8 + $0x24] sm:$0xf]
    %v170 = vld [vmem:[#allocation8 + $0x28] sm:$0xf]
    %v171 = vld [vmem:[#allocation8 + $0x2c] sm:$0xf]
    %v172 = vld [vmem:[#allocation8 + $0x30] sm:$0xf]
    %v173 = vld [vmem:[#allocation8 + $0x34] sm:$0xf]
    %v174 = vld [vmem:[#allocation8 + $0x38] sm:$0xf]
    %v175 = vld [vmem:[#allocation8 + $0x3c] sm:$0xf]
    %v176 = vld [vmem:[#allocation11] sm:$0xf]
    %v177 = vld [vmem:[#allocation11 + $0x4] sm:$0xf]
    %v178 = vld [vmem:[#allocation11 + $0x8] sm:$0xf]
    %v179 = vld [vmem:[#allocation11 + $0xc] sm:$0xf]
    %v180 = vld [vmem:[#allocation11 + $0x10] sm:$0xf]
    %v181 = vld [vmem:[#allocation11 + $0x14] sm:$0xf]
    %v182 = vld [vmem:[#allocation11 + $0x18] sm:$0xf]
    %v183 = vld [vmem:[#allocation11 + $0x1c] sm:$0xf]
    %v184 = vld [vmem:[#allocation11 + $0x20] sm:$0xf]
    %v185 = vld [vmem:[#allocation11 + $0x24] sm:$0xf]
    %v186 = vld [vmem:[#allocation11 + $0x28] sm:$0xf]
    %v187 = vld [vmem:[#allocation11 + $0x2c] sm:$0xf]
    %v188 = vld [vmem:[#allocation11 + $0x30] sm:$0xf]
    %v189 = vld [vmem:[#allocation11 + $0x34] sm:$0xf]
    %v190 = vld [vmem:[#allocation11 + $0x38] sm:$0xf]
    %v191 = vld [vmem:[#allocation11 + $0x3c] sm:$0xf]
    %v192 = vld [vmem:[%s3] sm:$0x1]
    %v193 = vld [vmem:[%s6] sm:$0x1]
    %v194 = vld [vmem:[#allocation3] sm:$0xf]
    %v195 = vld [vmem:[#allocation3 + $0x4] sm:$0xf]
    %v196 = vld [vmem:[#allocation3 + $0x8] sm:$0xf]
    %v197 = vld [vmem:[#allocation3 + $0xc] sm:$0xf]
    %v198 = vld [vmem:[#allocation3 + $0x10] sm:$0xf]
    %v199 = vld [vmem:[#allocation3 + $0x14] sm:$0xf]
    %v200 = vld [vmem:[#allocation3 + $0x18] sm:$0xf]
    %v201 = vld [vmem:[#allocation3 + $0x1c] sm:$0xf]
    %v203 = vperm.slane %v192, 0
    %v213 = vunpack.c.l.b16 %v194
    %v214 = vunpack.c.l.b16 %v195
    %v215 = vunpack.c.l.b16 %v196
    %v216 = vunpack.c.l.b16 %v197
    %v217 = vunpack.c.l.b16 %v198
    %v218 = vunpack.c.l.b16 %v199
    %v219 = vunpack.c.l.b16 %v200
    %v220 = vunpack.c.l.b16 %v201
    %v221 = vpack.c.b16 %v214, %v213
    %v222 = vpack.c.b16 %v216, %v215
    %v223 = vpack.c.b16 %v218, %v217
    %v224 = vpack.c.b16 %v220, %v219
    %v245 = vunpack.c.l.b16 %v128
    %v246 = vunpack.c.l.b16 %v129
    %v247 = vunpack.c.l.b16 %v130
    %v248 = vunpack.c.l.b16 %v131
    %v249 = vunpack.c.l.b16 %v132
    %v250 = vunpack.c.l.b16 %v133
    %v251 = vunpack.c.l.b16 %v134
    %v252 = vunpack.c.l.b16 %v135
    %v253 = vunpack.c.l.b16 %v136
    %v254 = vunpack.c.l.b16 %v137
    %v255 = vunpack.c.l.b16 %v138
    %v256 = vunpack.c.l.b16 %v139
    %v257 = vunpack.c.l.b16 %v140
    %v258 = vunpack.c.l.b16 %v141
    %v259 = vunpack.c.l.b16 %v142
    %v260 = vunpack.c.l.b16 %v143
    %v261 = vpack.c.b16 %v246, %v245
    %v262 = vpack.c.b16 %v248, %v247
    %v263 = vpack.c.b16 %v250, %v249
    %v264 = vpack.c.b16 %v252, %v251
    %v265 = vpack.c.b16 %v254, %v253
    %v266 = vpack.c.b16 %v256, %v255
    %v267 = vpack.c.b16 %v258, %v257
    %v268 = vpack.c.b16 %v260, %v259
    %277 = vmatpush.bf16.msra.mxu0 %v268
    %278 = vmatpush.bf16.msra.mxu0 %v267
    %279 = vmatpush.bf16.msra.mxu0 %v266
    %280 = vmatpush.bf16.msra.mxu0 %v265
    %281 = vmatpush.bf16.msra.mxu0 %v264
    %282 = vmatpush.bf16.msra.mxu0 %v263
    %283 = vmatpush.bf16.msra.mxu0 %v262
    %284 = vmatpush.bf16.msra.mxu0 %v261
    %285 = vmatmul.bf16.gmra.mxu0 %v221
    %v286 = vpop.f32.mrf.mxu0
    %v287 = vadd.f32 %v203, %v286
    %v288 = vpop.f32.mrf.mxu0
    %v289 = vadd.f32 %v203, %v288
    %290 = vmatmul.bf16.gmra.mxu0 %v222
    %v291 = vpop.f32.mrf.mxu0
    %v292 = vadd.f32 %v203, %v291
    %v293 = vpop.f32.mrf.mxu0
    %v294 = vadd.f32 %v203, %v293
    %295 = vmatmul.bf16.gmra.mxu0 %v223
    %v296 = vpop.f32.mrf.mxu0
    %v297 = vadd.f32 %v203, %v296
    %v298 = vpop.f32.mrf.mxu0
    %v299 = vadd.f32 %v203, %v298
    %300 = vmatmul.bf16.gmra.mxu0 %v224
    %v301 = vpop.f32.mrf.mxu0
    %v302 = vadd.f32 %v203, %v301
    %v303 = vpop.f32.mrf.mxu0
    %v304 = vadd.f32 %v203, %v303
    %305 = vdwg.mxu0
    %306 = vst [vmem:[#allocation2] sm:$0xff] %v287
    %307 = vst [vmem:[#allocation2 + $0x8] sm:$0xff] %v289
    %308 = vst [vmem:[#allocation2 + $0x10] sm:$0xff] %v292
    %309 = vst [vmem:[#allocation2 + $0x18] sm:$0xff] %v294
    %310 = vst [vmem:[#allocation2 + $0x20] sm:$0xff] %v297
    %311 = vst [vmem:[#allocation2 + $0x28] sm:$0xff] %v299
    %312 = vst [vmem:[#allocation2 + $0x30] sm:$0xff] %v302
    %313 = vst [vmem:[#allocation2 + $0x38] sm:$0xff] %v304
    %v314 = vld [vmem:[#allocation2] sm:$0xff]
    %v331 = vunpack.c.l.b16 %v160
    %v332 = vunpack.c.l.b16 %v161
    %v333 = vunpack.c.l.b16 %v162
    %v334 = vunpack.c.l.b16 %v163
    %v335 = vunpack.c.l.b16 %v164
    %v336 = vunpack.c.l.b16 %v165
    %v337 = vunpack.c.l.b16 %v166
    %v338 = vunpack.c.l.b16 %v167
    %v339 = vunpack.c.l.b16 %v168
    %v340 = vunpack.c.l.b16 %v169
    %v341 = vunpack.c.l.b16 %v170
    %v342 = vunpack.c.l.b16 %v171
    %v343 = vunpack.c.l.b16 %v172
    %v344 = vunpack.c.l.b16 %v173
    %v345 = vunpack.c.l.b16 %v174
    %v346 = vunpack.c.l.b16 %v175
    %v347 = vpack.c.b16 %v332, %v331
    %v348 = vpack.c.b16 %v334, %v333
    %v349 = vpack.c.b16 %v336, %v335
    %v350 = vpack.c.b16 %v338, %v337
    %v351 = vpack.c.b16 %v340, %v339
    %v352 = vpack.c.b16 %v342, %v341
    %v353 = vpack.c.b16 %v344, %v343
    %v354 = vpack.c.b16 %v346, %v345
    %363 = vmatpush.bf16.msra.mxu0 %v354
    %364 = vmatpush.bf16.msra.mxu0 %v353
    %365 = vmatpush.bf16.msra.mxu0 %v352
    %366 = vmatpush.bf16.msra.mxu0 %v351
    %367 = vmatpush.bf16.msra.mxu0 %v350
    %368 = vmatpush.bf16.msra.mxu0 %v349
    %369 = vmatpush.bf16.msra.mxu0 %v348
    %370 = vmatpush.bf16.msra.mxu0 %v347
    %371 = vmatmul.bf16.gmra.mxu0 0
    %v372 = vpop.f32.mrf.mxu0
    %v373 = vadd.f32 0.0, %v372
    %v374 = vpop.f32.mrf.mxu0
    %375 = vdwg.mxu0
    %v376 = vadd.f32 %v314, %v373
    %v377 = vtanh.pop %v376
    %v378 = vld [vmem:[#allocation2 + $0x8] sm:$0xff]
    %v379 = vpack.c.bf16 %v377, %v377
    %380 = vmatpush.bf16.msra.mxu0 %v354
    %381 = vmatpush.bf16.msra.mxu0 %v353
    %382 = vmatpush.bf16.msra.mxu0 %v352
    %383 = vmatpush.bf16.msra.mxu0 %v351
    %384 = vmatpush.bf16.msra.mxu0 %v350
    %385 = vmatpush.bf16.msra.mxu0 %v349
    %386 = vmatpush.bf16.msra.mxu0 %v348
    %387 = vmatpush.bf16.msra.mxu0 %v347
    %388 = vmatmul.bf16.gmra.mxu0 %v379
    %v389 = vpop.f32.mrf.mxu0
    %v390 = vadd.f32 0.0, %v389
    %v391 = vpop.f32.mrf.mxu0
    %392 = vdwg.mxu0
    %v393 = vadd.f32 %v378, %v390
    %v394 = vtanh.pop %v393
    %v396 = vperm.slane %v193, 0
    %v414 = vunpack.c.l.b16 %v144
    %v415 = vunpack.c.l.b16 %v145
    %v416 = vunpack.c.l.b16 %v146
    %v417 = vunpack.c.l.b16 %v147
    %v418 = vunpack.c.l.b16 %v148
    %v419 = vunpack.c.l.b16 %v149
    %v420 = vunpack.c.l.b16 %v150
    %v421 = vunpack.c.l.b16 %v151
    %v422 = vunpack.c.l.b16 %v152
    %v423 = vunpack.c.l.b16 %v153
    %v424 = vunpack.c.l.b16 %v154
    %v425 = vunpack.c.l.b16 %v155
    %v426 = vunpack.c.l.b16 %v156
    %v427 = vunpack.c.l.b16 %v157
    %v428 = vunpack.c.l.b16 %v158
    %v429 = vunpack.c.l.b16 %v159
    %v430 = vpack.c.b16 %v415, %v414
    %v431 = vpack.c.b16 %v417, %v416
    %v432 = vpack.c.b16 %v419, %v418
    %v433 = vpack.c.b16 %v421, %v420
    %v434 = vpack.c.b16 %v423, %v422
    %v435 = vpack.c.b16 %v425, %v424
    %v436 = vpack.c.b16 %v427, %v426
    %v437 = vpack.c.b16 %v429, %v428
    %446 = vmatpush.bf16.msra.mxu0 %v437
    %447 = vmatpush.bf16.msra.mxu0 %v436
    %448 = vmatpush.bf16.msra.mxu0 %v435
    %449 = vmatpush.bf16.msra.mxu0 %v434
    %450 = vmatpush.bf16.msra.mxu0 %v433
    %451 = vmatpush.bf16.msra.mxu0 %v432
    %452 = vmatpush.bf16.msra.mxu0 %v431
    %453 = vmatpush.bf16.msra.mxu0 %v430
    %454 = vmatmul.bf16.gmra.mxu0 %v379
    %v455 = vpop.f32.mrf.mxu0
    %v456 = vadd.f32 %v396, %v455
    %v457 = vpop.f32.mrf.mxu0
    %458 = vdwg.mxu0
    %v475 = vunpack.c.l.b16 %v176
    %v476 = vunpack.c.l.b16 %v177
    %v477 = vunpack.c.l.b16 %v178
    %v478 = vunpack.c.l.b16 %v179
    %v479 = vunpack.c.l.b16 %v180
    %v480 = vunpack.c.l.b16 %v181
    %v481 = vunpack.c.l.b16 %v182
    %v482 = vunpack.c.l.b16 %v183
    %v483 = vunpack.c.l.b16 %v184
    %v484 = vunpack.c.l.b16 %v185
    %v485 = vunpack.c.l.b16 %v186
    %v486 = vunpack.c.l.b16 %v187
    %v487 = vunpack.c.l.b16 %v188
    %v488 = vunpack.c.l.b16 %v189
    %v489 = vunpack.c.l.b16 %v190
    %v490 = vunpack.c.l.b16 %v191
    %v491 = vpack.c.b16 %v476, %v475
    %v492 = vpack.c.b16 %v478, %v477
    %v493 = vpack.c.b16 %v480, %v479
    %v494 = vpack.c.b16 %v482, %v481
    %v495 = vpack.c.b16 %v484, %v483
    %v496 = vpack.c.b16 %v486, %v485
    %v497 = vpack.c.b16 %v488, %v487
    %v498 = vpack.c.b16 %v490, %v489
    %507 = vmatpush.bf16.msra.mxu0 %v498
    %508 = vmatpush.bf16.msra.mxu0 %v497
    %509 = vmatpush.bf16.msra.mxu0 %v496
    %510 = vmatpush.bf16.msra.mxu0 %v495
    %511 = vmatpush.bf16.msra.mxu0 %v494
    %512 = vmatpush.bf16.msra.mxu0 %v493
    %513 = vmatpush.bf16.msra.mxu0 %v492
    %514 = vmatpush.bf16.msra.mxu0 %v491
    %515 = vmatmul.bf16.gmra.mxu0 0
    %v516 = vpop.f32.mrf.mxu0
    %v517 = vadd.f32 0.0, %v516
    %v518 = vpop.f32.mrf.mxu0
    %519 = vdwg.mxu0
    %v520 = vadd.f32 %v456, %v517
    %v521 = vtanh.pop %v520
    %v522 = vpack.c.bf16 %v521, %v521
    %v523 = vld [vmem:[#allocation12] sm:$0xf]
    %v524 = vld [vmem:[#allocation12 + $0x4] sm:$0xf]
    %v525 = vld [vmem:[#allocation12 + $0x8] sm:$0xf]
    %v526 = vld [vmem:[#allocation12 + $0xc] sm:$0xf]
    %v527 = vld [vmem:[#allocation12 + $0x10] sm:$0xf]
    %v528 = vld [vmem:[#allocation12 + $0x14] sm:$0xf]
    %v529 = vld [vmem:[#allocation12 + $0x18] sm:$0xf]
    %v530 = vld [vmem:[#allocation12 + $0x1c] sm:$0xf]
    %v531 = vld [vmem:[#allocation12 + $0x20] sm:$0xf]
    %v532 = vld [vmem:[#allocation12 + $0x24] sm:$0xf]
    %v533 = vld [vmem:[#allocation12 + $0x28] sm:$0xf]
    %v534 = vld [vmem:[#allocation12 + $0x2c] sm:$0xf]
    %v535 = vld [vmem:[#allocation12 + $0x30] sm:$0xf]
    %v536 = vld [vmem:[#allocation12 + $0x34] sm:$0xf]
    %v537 = vld [vmem:[#allocation12 + $0x38] sm:$0xf]
    %v538 = vld [vmem:[#allocation12 + $0x3c] sm:$0xf]
    %v539 = vld [vmem:[#allocation2 + $0x10] sm:$0xff]
    %v540 = vpack.c.bf16 %v394, %v394
    %541 = vmatpush.bf16.msra.mxu0 %v354
    %542 = vmatpush.bf16.msra.mxu0 %v353
    %543 = vmatpush.bf16.msra.mxu0 %v352
    %544 = vmatpush.bf16.msra.mxu0 %v351
    %545 = vmatpush.bf16.msra.mxu0 %v350
    %546 = vmatpush.bf16.msra.mxu0 %v349
    %547 = vmatpush.bf16.msra.mxu0 %v348
    %548 = vmatpush.bf16.msra.mxu0 %v347
    %549 = vmatmul.bf16.gmra.mxu0 %v540
    %v550 = vpop.f32.mrf.mxu0
    %v551 = vadd.f32 0.0, %v550
    %v552 = vpop.f32.mrf.mxu0
    %553 = vdwg.mxu0
    %v554 = vadd.f32 %v539, %v551
    %v555 = vtanh.pop %v554
    %556 = vmatpush.bf16.msra.mxu0 %v437
    %557 = vmatpush.bf16.msra.mxu0 %v436
    %558 = vmatpush.bf16.msra.mxu0 %v435
    %559 = vmatpush.bf16.msra.mxu0 %v434
    %560 = vmatpush.bf16.msra.mxu0 %v433
    %561 = vmatpush.bf16.msra.mxu0 %v432
    %562 = vmatpush.bf16.msra.mxu0 %v431
    %563 = vmatpush.bf16.msra.mxu0 %v430
    %564 = vmatmul.bf16.gmra.mxu0 %v540
    %v565 = vpop.f32.mrf.mxu0
    %v566 = vadd.f32 %v396, %v565
    %v567 = vpop.f32.mrf.mxu0
    %568 = vdwg.mxu0
    %569 = vmatpush.bf16.msra.mxu0 %v498
    %570 = vmatpush.bf16.msra.mxu0 %v497
    %571 = vmatpush.bf16.msra.mxu0 %v496
    %572 = vmatpush.bf16.msra.mxu0 %v495
    %573 = vmatpush.bf16.msra.mxu0 %v494
    %574 = vmatpush.bf16.msra.mxu0 %v493
    %575 = vmatpush.bf16.msra.mxu0 %v492
    %576 = vmatpush.bf16.msra.mxu0 %v491
    %577 = vmatmul.bf16.gmra.mxu0 %v522
    %v578 = vpop.f32.mrf.mxu0
    %v579 = vadd.f32 0.0, %v578
    %v580 = vpop.f32.mrf.mxu0
    %581 = vdwg.mxu0
    %v582 = vadd.f32 %v566, %v579
    %v583 = vtanh.pop %v582
    %v584 = vpack.c.bf16 %v583, %v583
    %s585 = scalar_lea.vmem [#allocation12], 64
    %v586 = vld [vmem:[%s585] sm:$0xf]
    %v587 = vld [vmem:[%s585 + $0x4] sm:$0xf]
    %v588 = vld [vmem:[%s585 + $0x8] sm:$0xf]
    %v589 = vld [vmem:[%s585 + $0xc] sm:$0xf]
    %v590 = vld [vmem:[%s585 + $0x10] sm:$0xf]
    %v591 = vld [vmem:[%s585 + $0x14] sm:$0xf]
    %v592 = vld [vmem:[%s585 + $0x18] sm:$0xf]
    %v593 = vld [vmem:[%s585 + $0x1c] sm:$0xf]
    %v594 = vld [vmem:[%s585 + $0x20] sm:$0xf]
    %v595 = vld [vmem:[%s585 + $0x24] sm:$0xf]
    %v596 = vld [vmem:[%s585 + $0x28] sm:$0xf]
    %v597 = vld [vmem:[%s585 + $0x2c] sm:$0xf]
    %v598 = vld [vmem:[%s585 + $0x30] sm:$0xf]
    %v599 = vld [vmem:[%s585 + $0x34] sm:$0xf]
    %v600 = vld [vmem:[%s585 + $0x38] sm:$0xf]
    %v601 = vld [vmem:[%s585 + $0x3c] sm:$0xf]
    %v618 = vunpack.c.l.b16 %v586
    %v619 = vunpack.c.l.b16 %v587
    %v620 = vunpack.c.l.b16 %v588
    %v621 = vunpack.c.l.b16 %v589
    %v622 = vunpack.c.l.b16 %v590
    %v623 = vunpack.c.l.b16 %v591
    %v624 = vunpack.c.l.b16 %v592
    %v625 = vunpack.c.l.b16 %v593
    %v626 = vunpack.c.l.b16 %v594
    %v627 = vunpack.c.l.b16 %v595
    %v628 = vunpack.c.l.b16 %v596
    %v629 = vunpack.c.l.b16 %v597
    %v630 = vunpack.c.l.b16 %v598
    %v631 = vunpack.c.l.b16 %v599
    %v632 = vunpack.c.l.b16 %v600
    %v633 = vunpack.c.l.b16 %v601
    %v634 = vpack.c.b16 %v619, %v618
    %v635 = vpack.c.b16 %v621, %v620
    %v636 = vpack.c.b16 %v623, %v622
    %v637 = vpack.c.b16 %v625, %v624
    %v638 = vpack.c.b16 %v627, %v626
    %v639 = vpack.c.b16 %v629, %v628
    %v640 = vpack.c.b16 %v631, %v630
    %v641 = vpack.c.b16 %v633, %v632
    %650 = vmatpush.bf16.msra.mxu0 %v641
    %651 = vmatpush.bf16.msra.mxu0 %v640
    %652 = vmatpush.bf16.msra.mxu0 %v639
    %653 = vmatpush.bf16.msra.mxu0 %v638
    %654 = vmatpush.bf16.msra.mxu0 %v637
    %655 = vmatpush.bf16.msra.mxu0 %v636
    %656 = vmatpush.bf16.msra.mxu0 %v635
    %657 = vmatpush.bf16.msra.mxu0 %v634
    %658 = vmatmul.bf16.gmra.mxu0 %v584
    %v659 = vpop.f32.mrf.mxu0
    %v660 = vadd.f32 0.0, %v659
    %v661 = vpop.f32.mrf.mxu0
    %662 = vdwg.mxu0
    %v679 = vunpack.c.l.b16 %v523
    %v680 = vunpack.c.l.b16 %v524
    %v681 = vunpack.c.l.b16 %v525
    %v682 = vunpack.c.l.b16 %v526
    %v683 = vunpack.c.l.b16 %v527
    %v684 = vunpack.c.l.b16 %v528
    %v685 = vunpack.c.l.b16 %v529
    %v686 = vunpack.c.l.b16 %v530
    %v687 = vunpack.c.l.b16 %v531
    %v688 = vunpack.c.l.b16 %v532
    %v689 = vunpack.c.l.b16 %v533
    %v690 = vunpack.c.l.b16 %v534
    %v691 = vunpack.c.l.b16 %v535
    %v692 = vunpack.c.l.b16 %v536
    %v693 = vunpack.c.l.b16 %v537
    %v694 = vunpack.c.l.b16 %v538
    %v695 = vpack.c.b16 %v680, %v679
    %v696 = vpack.c.b16 %v682, %v681
    %v697 = vpack.c.b16 %v684, %v683
    %v698 = vpack.c.b16 %v686, %v685
    %v699 = vpack.c.b16 %v688, %v687
    %v700 = vpack.c.b16 %v690, %v689
    %v701 = vpack.c.b16 %v692, %v691
    %v702 = vpack.c.b16 %v694, %v693
    %711 = vmatpush.bf16.msra.mxu0 %v702
    %712 = vmatpush.bf16.msra.mxu0 %v701
    %713 = vmatpush.bf16.msra.mxu0 %v700
    %714 = vmatpush.bf16.msra.mxu0 %v699
    %715 = vmatpush.bf16.msra.mxu0 %v698
    %716 = vmatpush.bf16.msra.mxu0 %v697
    %717 = vmatpush.bf16.msra.mxu0 %v696
    %718 = vmatpush.bf16.msra.mxu0 %v695
    %719 = vmatmul.bf16.gmra.mxu0 %v522
    %v720 = vpop.f32.mrf.mxu0
    %v721 = vadd.f32 %v660, %v720
    %v722 = vpop.f32.mrf.mxu0
    %723 = vdwg.mxu0
    %v724 = vld [vmem:[#allocation2 + $0x18] sm:$0xff]
    %v725 = vpack.c.bf16 %v555, %v555
    %726 = vmatpush.bf16.msra.mxu0 %v354
    %727 = vmatpush.bf16.msra.mxu0 %v353
    %728 = vmatpush.bf16.msra.mxu0 %v352
    %729 = vmatpush.bf16.msra.mxu0 %v351
    %730 = vmatpush.bf16.msra.mxu0 %v350
    %731 = vmatpush.bf16.msra.mxu0 %v349
    %732 = vmatpush.bf16.msra.mxu0 %v348
    %733 = vmatpush.bf16.msra.mxu0 %v347
    %734 = vmatmul.bf16.gmra.mxu0 %v725
    %v735 = vpop.f32.mrf.mxu0
    %v736 = vadd.f32 0.0, %v735
    %v737 = vpop.f32.mrf.mxu0
    %738 = vdwg.mxu0
    %v739 = vadd.f32 %v724, %v736
    %v740 = vtanh.pop %v739
    %741 = vmatpush.bf16.msra.mxu0 %v437
    %742 = vmatpush.bf16.msra.mxu0 %v436
    %743 = vmatpush.bf16.msra.mxu0 %v435
    %744 = vmatpush.bf16.msra.mxu0 %v434
    %745 = vmatpush.bf16.msra.mxu0 %v433
    %746 = vmatpush.bf16.msra.mxu0 %v432
    %747 = vmatpush.bf16.msra.mxu0 %v431
    %748 = vmatpush.bf16.msra.mxu0 %v430
    %749 = vmatmul.bf16.gmra.mxu0 %v725
    %v750 = vpop.f32.mrf.mxu0
    %v751 = vadd.f32 %v396, %v750
    %v752 = vpop.f32.mrf.mxu0
    %753 = vdwg.mxu0
    %754 = vmatpush.bf16.msra.mxu0 %v498
    %755 = vmatpush.bf16.msra.mxu0 %v497
    %756 = vmatpush.bf16.msra.mxu0 %v496
    %757 = vmatpush.bf16.msra.mxu0 %v495
    %758 = vmatpush.bf16.msra.mxu0 %v494
    %759 = vmatpush.bf16.msra.mxu0 %v493
    %760 = vmatpush.bf16.msra.mxu0 %v492
    %761 = vmatpush.bf16.msra.mxu0 %v491
    %762 = vmatmul.bf16.gmra.mxu0 %v584
    %v763 = vpop.f32.mrf.mxu0
    %v764 = vadd.f32 0.0, %v763
    %v765 = vpop.f32.mrf.mxu0
    %766 = vdwg.mxu0
    %v767 = vadd.f32 %v751, %v764
    %v768 = vtanh.pop %v767
    %v769 = vpack.c.bf16 %v768, %v768
    %s770 = scalar_lea.vmem [#allocation12], 128
    %v771 = vld [vmem:[%s770] sm:$0xf]
    %v772 = vld [vmem:[%s770 + $0x4] sm:$0xf]
    %v773 = vld [vmem:[%s770 + $0x8] sm:$0xf]
    %v774 = vld [vmem:[%s770 + $0xc] sm:$0xf]
    %v775 = vld [vmem:[%s770 + $0x10] sm:$0xf]
    %v776 = vld [vmem:[%s770 + $0x14] sm:$0xf]
    %v777 = vld [vmem:[%s770 + $0x18] sm:$0xf]
    %v778 = vld [vmem:[%s770 + $0x1c] sm:$0xf]
    %v779 = vld [vmem:[%s770 + $0x20] sm:$0xf]
    %v780 = vld [vmem:[%s770 + $0x24] sm:$0xf]
    %v781 = vld [vmem:[%s770 + $0x28] sm:$0xf]
    %v782 = vld [vmem:[%s770 + $0x2c] sm:$0xf]
    %v783 = vld [vmem:[%s770 + $0x30] sm:$0xf]
    %v784 = vld [vmem:[%s770 + $0x34] sm:$0xf]
    %v785 = vld [vmem:[%s770 + $0x38] sm:$0xf]
    %v786 = vld [vmem:[%s770 + $0x3c] sm:$0xf]
    %v803 = vunpack.c.l.b16 %v771
    %v804 = vunpack.c.l.b16 %v772
    %v805 = vunpack.c.l.b16 %v773
    %v806 = vunpack.c.l.b16 %v774
    %v807 = vunpack.c.l.b16 %v775
    %v808 = vunpack.c.l.b16 %v776
    %v809 = vunpack.c.l.b16 %v777
    %v810 = vunpack.c.l.b16 %v778
    %v811 = vunpack.c.l.b16 %v779
    %v812 = vunpack.c.l.b16 %v780
    %v813 = vunpack.c.l.b16 %v781
    %v814 = vunpack.c.l.b16 %v782
    %v815 = vunpack.c.l.b16 %v783
    %v816 = vunpack.c.l.b16 %v784
    %v817 = vunpack.c.l.b16 %v785
    %v818 = vunpack.c.l.b16 %v786
    %v819 = vpack.c.b16 %v804, %v803
    %v820 = vpack.c.b16 %v806, %v805
    %v821 = vpack.c.b16 %v808, %v807
    %v822 = vpack.c.b16 %v810, %v809
    %v823 = vpack.c.b16 %v812, %v811
    %v824 = vpack.c.b16 %v814, %v813
    %v825 = vpack.c.b16 %v816, %v815
    %v826 = vpack.c.b16 %v818, %v817
    %835 = vmatpush.bf16.msra.mxu0 %v826
    %836 = vmatpush.bf16.msra.mxu0 %v825
    %837 = vmatpush.bf16.msra.mxu0 %v824
    %838 = vmatpush.bf16.msra.mxu0 %v823
    %839 = vmatpush.bf16.msra.mxu0 %v822
    %840 = vmatpush.bf16.msra.mxu0 %v821
    %841 = vmatpush.bf16.msra.mxu0 %v820
    %842 = vmatpush.bf16.msra.mxu0 %v819
    %843 = vmatmul.bf16.gmra.mxu0 %v769
    %v844 = vpop.f32.mrf.mxu0
    %v845 = vadd.f32 0.0, %v844
    %v846 = vpop.f32.mrf.mxu0
    %847 = vdwg.mxu0
    %v848 = vadd.f32 %v721, %v845
    %v849 = vld [vmem:[#allocation2 + $0x20] sm:$0xff]
    %v850 = vpack.c.bf16 %v740, %v740
    %851 = vmatpush.bf16.msra.mxu0 %v354
    %852 = vmatpush.bf16.msra.mxu0 %v353
    %853 = vmatpush.bf16.msra.mxu0 %v352
    %854 = vmatpush.bf16.msra.mxu0 %v351
    %855 = vmatpush.bf16.msra.mxu0 %v350
    %856 = vmatpush.bf16.msra.mxu0 %v349
    %857 = vmatpush.bf16.msra.mxu0 %v348
    %858 = vmatpush.bf16.msra.mxu0 %v347
    %859 = vmatmul.bf16.gmra.mxu0 %v850
    %v860 = vpop.f32.mrf.mxu0
    %v861 = vadd.f32 0.0, %v860
    %v862 = vpop.f32.mrf.mxu0
    %863 = vdwg.mxu0
    %v864 = vadd.f32 %v849, %v861
    %v865 = vtanh.pop %v864
    %866 = vmatpush.bf16.msra.mxu0 %v437
    %867 = vmatpush.bf16.msra.mxu0 %v436
    %868 = vmatpush.bf16.msra.mxu0 %v435
    %869 = vmatpush.bf16.msra.mxu0 %v434
    %870 = vmatpush.bf16.msra.mxu0 %v433
    %871 = vmatpush.bf16.msra.mxu0 %v432
    %872 = vmatpush.bf16.msra.mxu0 %v431
    %873 = vmatpush.bf16.msra.mxu0 %v430
    %874 = vmatmul.bf16.gmra.mxu0 %v850
    %v875 = vpop.f32.mrf.mxu0
    %v876 = vadd.f32 %v396, %v875
    %v877 = vpop.f32.mrf.mxu0
    %878 = vdwg.mxu0
    %879 = vmatpush.bf16.msra.mxu0 %v498
    %880 = vmatpush.bf16.msra.mxu0 %v497
    %881 = vmatpush.bf16.msra.mxu0 %v496
    %882 = vmatpush.bf16.msra.mxu0 %v495
    %883 = vmatpush.bf16.msra.mxu0 %v494
    %884 = vmatpush.bf16.msra.mxu0 %v493
    %885 = vmatpush.bf16.msra.mxu0 %v492
    %886 = vmatpush.bf16.msra.mxu0 %v491
    %887 = vmatmul.bf16.gmra.mxu0 %v769
    %v888 = vpop.f32.mrf.mxu0
    %v889 = vadd.f32 0.0, %v888
    %v890 = vpop.f32.mrf.mxu0
    %891 = vdwg.mxu0
    %v892 = vadd.f32 %v876, %v889
    %v893 = vtanh.pop %v892
    %v894 = vpack.c.bf16 %v893, %v893
    %s895 = scalar_lea.vmem [#allocation12], 192
    %v896 = vld [vmem:[%s895] sm:$0xf]
    %v897 = vld [vmem:[%s895 + $0x4] sm:$0xf]
    %v898 = vld [vmem:[%s895 + $0x8] sm:$0xf]
    %v899 = vld [vmem:[%s895 + $0xc] sm:$0xf]
    %v900 = vld [vmem:[%s895 + $0x10] sm:$0xf]
    %v901 = vld [vmem:[%s895 + $0x14] sm:$0xf]
    %v902 = vld [vmem:[%s895 + $0x18] sm:$0xf]
    %v903 = vld [vmem:[%s895 + $0x1c] sm:$0xf]
    %v904 = vld [vmem:[%s895 + $0x20] sm:$0xf]
    %v905 = vld [vmem:[%s895 + $0x24] sm:$0xf]
    %v906 = vld [vmem:[%s895 + $0x28] sm:$0xf]
    %v907 = vld [vmem:[%s895 + $0x2c] sm:$0xf]
    %v908 = vld [vmem:[%s895 + $0x30] sm:$0xf]
    %v909 = vld [vmem:[%s895 + $0x34] sm:$0xf]
    %v910 = vld [vmem:[%s895 + $0x38] sm:$0xf]
    %v911 = vld [vmem:[%s895 + $0x3c] sm:$0xf]
    %v928 = vunpack.c.l.b16 %v896
    %v929 = vunpack.c.l.b16 %v897
    %v930 = vunpack.c.l.b16 %v898
    %v931 = vunpack.c.l.b16 %v899
    %v932 = vunpack.c.l.b16 %v900
    %v933 = vunpack.c.l.b16 %v901
    %v934 = vunpack.c.l.b16 %v902
    %v935 = vunpack.c.l.b16 %v903
    %v936 = vunpack.c.l.b16 %v904
    %v937 = vunpack.c.l.b16 %v905
    %v938 = vunpack.c.l.b16 %v906
    %v939 = vunpack.c.l.b16 %v907
    %v940 = vunpack.c.l.b16 %v908
    %v941 = vunpack.c.l.b16 %v909
    %v942 = vunpack.c.l.b16 %v910
    %v943 = vunpack.c.l.b16 %v911
    %v944 = vpack.c.b16 %v929, %v928
    %v945 = vpack.c.b16 %v931, %v930
    %v946 = vpack.c.b16 %v933, %v932
    %v947 = vpack.c.b16 %v935, %v934
    %v948 = vpack.c.b16 %v937, %v936
    %v949 = vpack.c.b16 %v939, %v938
    %v950 = vpack.c.b16 %v941, %v940
    %v951 = vpack.c.b16 %v943, %v942
    %960 = vmatpush.bf16.msra.mxu0 %v951
    %961 = vmatpush.bf16.msra.mxu0 %v950
    %962 = vmatpush.bf16.msra.mxu0 %v949
    %963 = vmatpush.bf16.msra.mxu0 %v948
    %964 = vmatpush.bf16.msra.mxu0 %v947
    %965 = vmatpush.bf16.msra.mxu0 %v946
    %966 = vmatpush.bf16.msra.mxu0 %v945
    %967 = vmatpush.bf16.msra.mxu0 %v944
    %968 = vmatmul.bf16.gmra.mxu0 %v894
    %v969 = vpop.f32.mrf.mxu0
    %v970 = vadd.f32 0.0, %v969
    %v971 = vpop.f32.mrf.mxu0
    %972 = vdwg.mxu0
    %v973 = vadd.f32 %v848, %v970
    %v974 = vld [vmem:[#allocation2 + $0x28] sm:$0xff]
    %v975 = vpack.c.bf16 %v865, %v865
    %976 = vmatpush.bf16.msra.mxu0 %v354
    %977 = vmatpush.bf16.msra.mxu0 %v353
    %978 = vmatpush.bf16.msra.mxu0 %v352
    %979 = vmatpush.bf16.msra.mxu0 %v351
    %980 = vmatpush.bf16.msra.mxu0 %v350
    %981 = vmatpush.bf16.msra.mxu0 %v349
    %982 = vmatpush.bf16.msra.mxu0 %v348
    %983 = vmatpush.bf16.msra.mxu0 %v347
    %984 = vmatmul.bf16.gmra.mxu0 %v975
    %v985 = vpop.f32.mrf.mxu0
    %v986 = vadd.f32 0.0, %v985
    %v987 = vpop.f32.mrf.mxu0
    %988 = vdwg.mxu0
    %v989 = vadd.f32 %v974, %v986
    %v990 = vtanh.pop %v989
    %991 = vmatpush.bf16.msra.mxu0 %v437
    %992 = vmatpush.bf16.msra.mxu0 %v436
    %993 = vmatpush.bf16.msra.mxu0 %v435
    %994 = vmatpush.bf16.msra.mxu0 %v434
    %995 = vmatpush.bf16.msra.mxu0 %v433
    %996 = vmatpush.bf16.msra.mxu0 %v432
    %997 = vmatpush.bf16.msra.mxu0 %v431
    %998 = vmatpush.bf16.msra.mxu0 %v430
    %999 = vmatmul.bf16.gmra.mxu0 %v975
    %v1000 = vpop.f32.mrf.mxu0
    %v1001 = vadd.f32 %v396, %v1000
    %v1002 = vpop.f32.mrf.mxu0
    %1003 = vdwg.mxu0
    %1004 = vmatpush.bf16.msra.mxu0 %v498
    %1005 = vmatpush.bf16.msra.mxu0 %v497
    %1006 = vmatpush.bf16.msra.mxu0 %v496
    %1007 = vmatpush.bf16.msra.mxu0 %v495
    %1008 = vmatpush.bf16.msra.mxu0 %v494
    %1009 = vmatpush.bf16.msra.mxu0 %v493
    %1010 = vmatpush.bf16.msra.mxu0 %v492
    %1011 = vmatpush.bf16.msra.mxu0 %v491
    %1012 = vmatmul.bf16.gmra.mxu0 %v894
    %v1013 = vpop.f32.mrf.mxu0
    %v1014 = vadd.f32 0.0, %v1013
    %v1015 = vpop.f32.mrf.mxu0
    %1016 = vdwg.mxu0
    %v1017 = vadd.f32 %v1001, %v1014
    %v1018 = vtanh.pop %v1017
    %v1019 = vpack.c.bf16 %v1018, %v1018
    %s1020 = scalar_lea.vmem [#allocation12], 256
    %v1021 = vld [vmem:[%s1020] sm:$0xf]
    %v1022 = vld [vmem:[%s1020 + $0x4] sm:$0xf]
    %v1023 = vld [vmem:[%s1020 + $0x8] sm:$0xf]
    %v1024 = vld [vmem:[%s1020 + $0xc] sm:$0xf]
    %v1025 = vld [vmem:[%s1020 + $0x10] sm:$0xf]
    %v1026 = vld [vmem:[%s1020 + $0x14] sm:$0xf]
    %v1027 = vld [vmem:[%s1020 + $0x18] sm:$0xf]
    %v1028 = vld [vmem:[%s1020 + $0x1c] sm:$0xf]
    %v1029 = vld [vmem:[%s1020 + $0x20] sm:$0xf]
    %v1030 = vld [vmem:[%s1020 + $0x24] sm:$0xf]
    %v1031 = vld [vmem:[%s1020 + $0x28] sm:$0xf]
    %v1032 = vld [vmem:[%s1020 + $0x2c] sm:$0xf]
    %v1033 = vld [vmem:[%s1020 + $0x30] sm:$0xf]
    %v1034 = vld [vmem:[%s1020 + $0x34] sm:$0xf]
    %v1035 = vld [vmem:[%s1020 + $0x38] sm:$0xf]
    %v1036 = vld [vmem:[%s1020 + $0x3c] sm:$0xf]
    %v1053 = vunpack.c.l.b16 %v1021
    %v1054 = vunpack.c.l.b16 %v1022
    %v1055 = vunpack.c.l.b16 %v1023
    %v1056 = vunpack.c.l.b16 %v1024
    %v1057 = vunpack.c.l.b16 %v1025
    %v1058 = vunpack.c.l.b16 %v1026
    %v1059 = vunpack.c.l.b16 %v1027
    %v1060 = vunpack.c.l.b16 %v1028
    %v1061 = vunpack.c.l.b16 %v1029
    %v1062 = vunpack.c.l.b16 %v1030
    %v1063 = vunpack.c.l.b16 %v1031
    %v1064 = vunpack.c.l.b16 %v1032
    %v1065 = vunpack.c.l.b16 %v1033
    %v1066 = vunpack.c.l.b16 %v1034
    %v1067 = vunpack.c.l.b16 %v1035
    %v1068 = vunpack.c.l.b16 %v1036
    %v1069 = vpack.c.b16 %v1054, %v1053
    %v1070 = vpack.c.b16 %v1056, %v1055
    %v1071 = vpack.c.b16 %v1058, %v1057
    %v1072 = vpack.c.b16 %v1060, %v1059
    %v1073 = vpack.c.b16 %v1062, %v1061
    %v1074 = vpack.c.b16 %v1064, %v1063
    %v1075 = vpack.c.b16 %v1066, %v1065
    %v1076 = vpack.c.b16 %v1068, %v1067
    %1085 = vmatpush.bf16.msra.mxu0 %v1076
    %1086 = vmatpush.bf16.msra.mxu0 %v1075
    %1087 = vmatpush.bf16.msra.mxu0 %v1074
    %1088 = vmatpush.bf16.msra.mxu0 %v1073
    %1089 = vmatpush.bf16.msra.mxu0 %v1072
    %1090 = vmatpush.bf16.msra.mxu0 %v1071
    %1091 = vmatpush.bf16.msra.mxu0 %v1070
    %1092 = vmatpush.bf16.msra.mxu0 %v1069
    %1093 = vmatmul.bf16.gmra.mxu0 %v1019
    %v1094 = vpop.f32.mrf.mxu0
    %v1095 = vadd.f32 0.0, %v1094
    %v1096 = vpop.f32.mrf.mxu0
    %1097 = vdwg.mxu0
    %v1098 = vadd.f32 %v973, %v1095
    %v1099 = vld [vmem:[#allocation2 + $0x30] sm:$0xff]
    %v1100 = vpack.c.bf16 %v990, %v990
    %1101 = vmatpush.bf16.msra.mxu0 %v354
    %1102 = vmatpush.bf16.msra.mxu0 %v353
    %1103 = vmatpush.bf16.msra.mxu0 %v352
    %1104 = vmatpush.bf16.msra.mxu0 %v351
    %1105 = vmatpush.bf16.msra.mxu0 %v350
    %1106 = vmatpush.bf16.msra.mxu0 %v349
    %1107 = vmatpush.bf16.msra.mxu0 %v348
    %1108 = vmatpush.bf16.msra.mxu0 %v347
    %1109 = vmatmul.bf16.gmra.mxu0 %v1100
    %v1110 = vpop.f32.mrf.mxu0
    %v1111 = vadd.f32 0.0, %v1110
    %v1112 = vpop.f32.mrf.mxu0
    %1113 = vdwg.mxu0
    %v1114 = vadd.f32 %v1099, %v1111
    %v1115 = vtanh.pop %v1114
    %1116 = vmatpush.bf16.msra.mxu0 %v437
    %1117 = vmatpush.bf16.msra.mxu0 %v436
    %1118 = vmatpush.bf16.msra.mxu0 %v435
    %1119 = vmatpush.bf16.msra.mxu0 %v434
    %1120 = vmatpush.bf16.msra.mxu0 %v433
    %1121 = vmatpush.bf16.msra.mxu0 %v432
    %1122 = vmatpush.bf16.msra.mxu0 %v431
    %1123 = vmatpush.bf16.msra.mxu0 %v430
    %1124 = vmatmul.bf16.gmra.mxu0 %v1100
    %v1125 = vpop.f32.mrf.mxu0
    %v1126 = vadd.f32 %v396, %v1125
    %v1127 = vpop.f32.mrf.mxu0
    %1128 = vdwg.mxu0
    %1129 = vmatpush.bf16.msra.mxu0 %v498
    %1130 = vmatpush.bf16.msra.mxu0 %v497
    %1131 = vmatpush.bf16.msra.mxu0 %v496
    %1132 = vmatpush.bf16.msra.mxu0 %v495
    %1133 = vmatpush.bf16.msra.mxu0 %v494
    %1134 = vmatpush.bf16.msra.mxu0 %v493
    %1135 = vmatpush.bf16.msra.mxu0 %v492
    %1136 = vmatpush.bf16.msra.mxu0 %v491
    %1137 = vmatmul.bf16.gmra.mxu0 %v1019
    %v1138 = vpop.f32.mrf.mxu0
    %v1139 = vadd.f32 0.0, %v1138
    %v1140 = vpop.f32.mrf.mxu0
    %1141 = vdwg.mxu0
    %v1142 = vadd.f32 %v1126, %v1139
    %v1143 = vtanh.pop %v1142
    %v1144 = vpack.c.bf16 %v1143, %v1143
    %s1145 = scalar_lea.vmem [#allocation12], 320
    %v1146 = vld [vmem:[%s1145] sm:$0xf]
    %v1147 = vld [vmem:[%s1145 + $0x4] sm:$0xf]
    %v1148 = vld [vmem:[%s1145 + $0x8] sm:$0xf]
    %v1149 = vld [vmem:[%s1145 + $0xc] sm:$0xf]
    %v1150 = vld [vmem:[%s1145 + $0x10] sm:$0xf]
    %v1151 = vld [vmem:[%s1145 + $0x14] sm:$0xf]
    %v1152 = vld [vmem:[%s1145 + $0x18] sm:$0xf]
    %v1153 = vld [vmem:[%s1145 + $0x1c] sm:$0xf]
    %v1154 = vld [vmem:[%s1145 + $0x20] sm:$0xf]
    %v1155 = vld [vmem:[%s1145 + $0x24] sm:$0xf]
    %v1156 = vld [vmem:[%s1145 + $0x28] sm:$0xf]
    %v1157 = vld [vmem:[%s1145 + $0x2c] sm:$0xf]
    %v1158 = vld [vmem:[%s1145 + $0x30] sm:$0xf]
    %v1159 = vld [vmem:[%s1145 + $0x34] sm:$0xf]
    %v1160 = vld [vmem:[%s1145 + $0x38] sm:$0xf]
    %v1161 = vld [vmem:[%s1145 + $0x3c] sm:$0xf]
    %v1178 = vunpack.c.l.b16 %v1146
    %v1179 = vunpack.c.l.b16 %v1147
    %v1180 = vunpack.c.l.b16 %v1148
    %v1181 = vunpack.c.l.b16 %v1149
    %v1182 = vunpack.c.l.b16 %v1150
    %v1183 = vunpack.c.l.b16 %v1151
    %v1184 = vunpack.c.l.b16 %v1152
    %v1185 = vunpack.c.l.b16 %v1153
    %v1186 = vunpack.c.l.b16 %v1154
    %v1187 = vunpack.c.l.b16 %v1155
    %v1188 = vunpack.c.l.b16 %v1156
    %v1189 = vunpack.c.l.b16 %v1157
    %v1190 = vunpack.c.l.b16 %v1158
    %v1191 = vunpack.c.l.b16 %v1159
    %v1192 = vunpack.c.l.b16 %v1160
    %v1193 = vunpack.c.l.b16 %v1161
    %v1194 = vpack.c.b16 %v1179, %v1178
    %v1195 = vpack.c.b16 %v1181, %v1180
    %v1196 = vpack.c.b16 %v1183, %v1182
    %v1197 = vpack.c.b16 %v1185, %v1184
    %v1198 = vpack.c.b16 %v1187, %v1186
    %v1199 = vpack.c.b16 %v1189, %v1188
    %v1200 = vpack.c.b16 %v1191, %v1190
    %v1201 = vpack.c.b16 %v1193, %v1192
    %1210 = vmatpush.bf16.msra.mxu0 %v1201
    %1211 = vmatpush.bf16.msra.mxu0 %v1200
    %1212 = vmatpush.bf16.msra.mxu0 %v1199
    %1213 = vmatpush.bf16.msra.mxu0 %v1198
    %1214 = vmatpush.bf16.msra.mxu0 %v1197
    %1215 = vmatpush.bf16.msra.mxu0 %v1196
    %1216 = vmatpush.bf16.msra.mxu0 %v1195
    %1217 = vmatpush.bf16.msra.mxu0 %v1194
    %1218 = vmatmul.bf16.gmra.mxu0 %v1144
    %v1219 = vpop.f32.mrf.mxu0
    %v1220 = vadd.f32 0.0, %v1219
    %v1221 = vpop.f32.mrf.mxu0
    %1222 = vdwg.mxu0
    %v1223 = vadd.f32 %v1098, %v1220
    %v1224 = vld [vmem:[#allocation2 + $0x38] sm:$0xff]
    %v1225 = vpack.c.bf16 %v1115, %v1115
    %1226 = vmatpush.bf16.msra.mxu0 %v354
    %1227 = vmatpush.bf16.msra.mxu0 %v353
    %1228 = vmatpush.bf16.msra.mxu0 %v352
    %1229 = vmatpush.bf16.msra.mxu0 %v351
    %1230 = vmatpush.bf16.msra.mxu0 %v350
    %1231 = vmatpush.bf16.msra.mxu0 %v349
    %1232 = vmatpush.bf16.msra.mxu0 %v348
    %1233 = vmatpush.bf16.msra.mxu0 %v347
    %1234 = vmatmul.bf16.gmra.mxu0 %v1225
    %v1235 = vpop.f32.mrf.mxu0
    %v1236 = vadd.f32 0.0, %v1235
    %v1237 = vpop.f32.mrf.mxu0
    %1238 = vdwg.mxu0
    %v1239 = vadd.f32 %v1224, %v1236
    %v1240 = vtanh.pop %v1239
    %1241 = vmatpush.bf16.msra.mxu0 %v437
    %1242 = vmatpush.bf16.msra.mxu0 %v436
    %1243 = vmatpush.bf16.msra.mxu0 %v435
    %1244 = vmatpush.bf16.msra.mxu0 %v434
    %1245 = vmatpush.bf16.msra.mxu0 %v433
    %1246 = vmatpush.bf16.msra.mxu0 %v432
    %1247 = vmatpush.bf16.msra.mxu0 %v431
    %1248 = vmatpush.bf16.msra.mxu0 %v430
    %1249 = vmatmul.bf16.gmra.mxu0 %v1225
    %v1250 = vpop.f32.mrf.mxu0
    %v1251 = vadd.f32 %v396, %v1250
    %v1252 = vpop.f32.mrf.mxu0
    %1253 = vdwg.mxu0
    %1254 = vmatpush.bf16.msra.mxu0 %v498
    %1255 = vmatpush.bf16.msra.mxu0 %v497
    %1256 = vmatpush.bf16.msra.mxu0 %v496
    %1257 = vmatpush.bf16.msra.mxu0 %v495
    %1258 = vmatpush.bf16.msra.mxu0 %v494
    %1259 = vmatpush.bf16.msra.mxu0 %v493
    %1260 = vmatpush.bf16.msra.mxu0 %v492
    %1261 = vmatpush.bf16.msra.mxu0 %v491
    %1262 = vmatmul.bf16.gmra.mxu0 %v1144
    %v1263 = vpop.f32.mrf.mxu0
    %v1264 = vadd.f32 0.0, %v1263
    %v1265 = vpop.f32.mrf.mxu0
    %1266 = vdwg.mxu0
    %v1267 = vadd.f32 %v1251, %v1264
    %v1268 = vtanh.pop %v1267
    %v1269 = vpack.c.bf16 %v1268, %v1268
    %s1270 = scalar_lea.vmem [#allocation12], 384
    %v1271 = vld [vmem:[%s1270] sm:$0xf]
    %v1272 = vld [vmem:[%s1270 + $0x4] sm:$0xf]
    %v1273 = vld [vmem:[%s1270 + $0x8] sm:$0xf]
    %v1274 = vld [vmem:[%s1270 + $0xc] sm:$0xf]
    %v1275 = vld [vmem:[%s1270 + $0x10] sm:$0xf]
    %v1276 = vld [vmem:[%s1270 + $0x14] sm:$0xf]
    %v1277 = vld [vmem:[%s1270 + $0x18] sm:$0xf]
    %v1278 = vld [vmem:[%s1270 + $0x1c] sm:$0xf]
    %v1279 = vld [vmem:[%s1270 + $0x20] sm:$0xf]
    %v1280 = vld [vmem:[%s1270 + $0x24] sm:$0xf]
    %v1281 = vld [vmem:[%s1270 + $0x28] sm:$0xf]
    %v1282 = vld [vmem:[%s1270 + $0x2c] sm:$0xf]
    %v1283 = vld [vmem:[%s1270 + $0x30] sm:$0xf]
    %v1284 = vld [vmem:[%s1270 + $0x34] sm:$0xf]
    %v1285 = vld [vmem:[%s1270 + $0x38] sm:$0xf]
    %v1286 = vld [vmem:[%s1270 + $0x3c] sm:$0xf]
    %v1303 = vunpack.c.l.b16 %v1271
    %v1304 = vunpack.c.l.b16 %v1272
    %v1305 = vunpack.c.l.b16 %v1273
    %v1306 = vunpack.c.l.b16 %v1274
    %v1307 = vunpack.c.l.b16 %v1275
    %v1308 = vunpack.c.l.b16 %v1276
    %v1309 = vunpack.c.l.b16 %v1277
    %v1310 = vunpack.c.l.b16 %v1278
    %v1311 = vunpack.c.l.b16 %v1279
    %v1312 = vunpack.c.l.b16 %v1280
    %v1313 = vunpack.c.l.b16 %v1281
    %v1314 = vunpack.c.l.b16 %v1282
    %v1315 = vunpack.c.l.b16 %v1283
    %v1316 = vunpack.c.l.b16 %v1284
    %v1317 = vunpack.c.l.b16 %v1285
    %v1318 = vunpack.c.l.b16 %v1286
    %v1319 = vpack.c.b16 %v1304, %v1303
    %v1320 = vpack.c.b16 %v1306, %v1305
    %v1321 = vpack.c.b16 %v1308, %v1307
    %v1322 = vpack.c.b16 %v1310, %v1309
    %v1323 = vpack.c.b16 %v1312, %v1311
    %v1324 = vpack.c.b16 %v1314, %v1313
    %v1325 = vpack.c.b16 %v1316, %v1315
    %v1326 = vpack.c.b16 %v1318, %v1317
    %1335 = vmatpush.bf16.msra.mxu0 %v1326
    %1336 = vmatpush.bf16.msra.mxu0 %v1325
    %1337 = vmatpush.bf16.msra.mxu0 %v1324
    %1338 = vmatpush.bf16.msra.mxu0 %v1323
    %1339 = vmatpush.bf16.msra.mxu0 %v1322
    %1340 = vmatpush.bf16.msra.mxu0 %v1321
    %1341 = vmatpush.bf16.msra.mxu0 %v1320
    %1342 = vmatpush.bf16.msra.mxu0 %v1319
    %1343 = vmatmul.bf16.gmra.mxu0 %v1269
    %v1344 = vpop.f32.mrf.mxu0
    %v1345 = vadd.f32 0.0, %v1344
    %v1346 = vpop.f32.mrf.mxu0
    %1347 = vdwg.mxu0
    %v1348 = vadd.f32 %v1223, %v1345
    %v1349 = vpack.c.bf16 %v1240, %v1240
    %1350 = vmatpush.bf16.msra.mxu0 %v437
    %1351 = vmatpush.bf16.msra.mxu0 %v436
    %1352 = vmatpush.bf16.msra.mxu0 %v435
    %1353 = vmatpush.bf16.msra.mxu0 %v434
    %1354 = vmatpush.bf16.msra.mxu0 %v433
    %1355 = vmatpush.bf16.msra.mxu0 %v432
    %1356 = vmatpush.bf16.msra.mxu0 %v431
    %1357 = vmatpush.bf16.msra.mxu0 %v430
    %1358 = vmatmul.bf16.gmra.mxu0 %v1349
    %v1359 = vpop.f32.mrf.mxu0
    %v1360 = vadd.f32 %v396, %v1359
    %v1361 = vpop.f32.mrf.mxu0
    %1362 = vdwg.mxu0
    %1363 = vmatpush.bf16.msra.mxu0 %v498
    %1364 = vmatpush.bf16.msra.mxu0 %v497
    %1365 = vmatpush.bf16.msra.mxu0 %v496
    %1366 = vmatpush.bf16.msra.mxu0 %v495
    %1367 = vmatpush.bf16.msra.mxu0 %v494
    %1368 = vmatpush.bf16.msra.mxu0 %v493
    %1369 = vmatpush.bf16.msra.mxu0 %v492
    %1370 = vmatpush.bf16.msra.mxu0 %v491
    %1371 = vmatmul.bf16.gmra.mxu0 %v1269
    %v1372 = vpop.f32.mrf.mxu0
    %v1373 = vadd.f32 0.0, %v1372
    %v1374 = vpop.f32.mrf.mxu0
    %1375 = vdwg.mxu0
    %v1376 = vadd.f32 %v1360, %v1373
    %v1377 = vtanh.pop %v1376
    %v1378 = vpack.c.bf16 %v1377, %v1377
    %s1379 = scalar_lea.vmem [#allocation12], 448
    %v1380 = vld [vmem:[%s1379] sm:$0xf]
    %v1381 = vld [vmem:[%s1379 + $0x4] sm:$0xf]
    %v1382 = vld [vmem:[%s1379 + $0x8] sm:$0xf]
    %v1383 = vld [vmem:[%s1379 + $0xc] sm:$0xf]
    %v1384 = vld [vmem:[%s1379 + $0x10] sm:$0xf]
    %v1385 = vld [vmem:[%s1379 + $0x14] sm:$0xf]
    %v1386 = vld [vmem:[%s1379 + $0x18] sm:$0xf]
    %v1387 = vld [vmem:[%s1379 + $0x1c] sm:$0xf]
    %v1388 = vld [vmem:[%s1379 + $0x20] sm:$0xf]
    %v1389 = vld [vmem:[%s1379 + $0x24] sm:$0xf]
    %v1390 = vld [vmem:[%s1379 + $0x28] sm:$0xf]
    %v1391 = vld [vmem:[%s1379 + $0x2c] sm:$0xf]
    %v1392 = vld [vmem:[%s1379 + $0x30] sm:$0xf]
    %v1393 = vld [vmem:[%s1379 + $0x34] sm:$0xf]
    %v1394 = vld [vmem:[%s1379 + $0x38] sm:$0xf]
    %v1395 = vld [vmem:[%s1379 + $0x3c] sm:$0xf]
    %v1412 = vunpack.c.l.b16 %v1380
    %v1413 = vunpack.c.l.b16 %v1381
    %v1414 = vunpack.c.l.b16 %v1382
    %v1415 = vunpack.c.l.b16 %v1383
    %v1416 = vunpack.c.l.b16 %v1384
    %v1417 = vunpack.c.l.b16 %v1385
    %v1418 = vunpack.c.l.b16 %v1386
    %v1419 = vunpack.c.l.b16 %v1387
    %v1420 = vunpack.c.l.b16 %v1388
    %v1421 = vunpack.c.l.b16 %v1389
    %v1422 = vunpack.c.l.b16 %v1390
    %v1423 = vunpack.c.l.b16 %v1391
    %v1424 = vunpack.c.l.b16 %v1392
    %v1425 = vunpack.c.l.b16 %v1393
    %v1426 = vunpack.c.l.b16 %v1394
    %v1427 = vunpack.c.l.b16 %v1395
    %v1428 = vpack.c.b16 %v1413, %v1412
    %v1429 = vpack.c.b16 %v1415, %v1414
    %v1430 = vpack.c.b16 %v1417, %v1416
    %v1431 = vpack.c.b16 %v1419, %v1418
    %v1432 = vpack.c.b16 %v1421, %v1420
    %v1433 = vpack.c.b16 %v1423, %v1422
    %v1434 = vpack.c.b16 %v1425, %v1424
    %v1435 = vpack.c.b16 %v1427, %v1426
    %1444 = vmatpush.bf16.msra.mxu0 %v1435
    %1445 = vmatpush.bf16.msra.mxu0 %v1434
    %1446 = vmatpush.bf16.msra.mxu0 %v1433
    %1447 = vmatpush.bf16.msra.mxu0 %v1432
    %1448 = vmatpush.bf16.msra.mxu0 %v1431
    %1449 = vmatpush.bf16.msra.mxu0 %v1430
    %1450 = vmatpush.bf16.msra.mxu0 %v1429
    %1451 = vmatpush.bf16.msra.mxu0 %v1428
    %1452 = vmatmul.bf16.gmra.mxu0 %v1378
    %v1453 = vpop.f32.mrf.mxu0
    %v1454 = vadd.f32 0.0, %v1453
    %v1455 = vpop.f32.mrf.mxu0
    %1456 = vdwg.mxu0
    %v1457 = vadd.f32 %v1348, %v1454
    %v1458 = vld [vmem:[%s8] sm:$0x1]
    %v1460 = vperm.slane %v1458, 0
    %v1462 = vadd.f32 %v1457, %v1460
    %1463 = vst [vmem:[#allocation14] sm:$0xff] %v1462
    // Predicated region
    $region62: #{tpu_custom_call.1} parent=1 // pred_check
      _
    $region63: #{tpu_custom_call.1} parent=1 // pred_check_branch
      %1465 = sbr.rel (0) target = $region65
    $region64: #{tpu_custom_call.1} parent=1 // pred_region
      %1467 = vsyncadd [#allocation5], 0
      %s1469 = sshll.u32 [#allocation14], 4
      %s1470 = int_to_ptr.vmem [resolvable:$true] %s1469
      %s1471 = sshll.u32 %s9, 4
      %s1472 = int_to_ptr.hbm [resolvable:$true] %s1471
      %1474 = dma.vmem_to_hbm [thread:$0]  %s1470, 128, %s1472, [#allocation5]
    $region65: #{tpu_custom_call.1} parent=1 // pred_fallthru
      _
    // Predicated region
    $region66: #{tpu_custom_call.1} parent=1 // pred_check
      _
    $region67: #{tpu_custom_call.1} parent=1 // pred_check_branch
      %1476 = sbr.rel (0) target = $region69
    $region68: #{tpu_custom_call.1} parent=1 // pred_region
      %1478 = dma.done [#allocation5], 128
    $region69: #{tpu_custom_call.1} parent=1 // pred_fallthru
      _
    %1479 = vsyncpa [#allocation4], 1
    %1480 = vsyncpa [#allocation7], 1
    %1481 = vsyncpa [#allocation10], 1
    %1482 = vsyncpa [#allocation13], 1
    %1483 = vsyncpa [#allocation5], 1

</llo_original>
